<compile_context>
chip_gen: v7x
topology: tpu7x:2x2x1
jax: 0.10.0
libtpu: 0.0.40
codegen_flags: <defaults>
</compile_context>

<pallas_src>
import functools

import jax
import jax.numpy as jnp
from jax.experimental import pallas as pl
from jax.experimental.pallas import tpu as pltpu

LANE = 128


def _round_up(n, m):
    return ((n + m - 1) // m) * m


def actor_kernel(x_ref, w1_ref, b1_ref, w2_ref, b2_ref, w3_ref, b3_ref, o_ref,
                 *, mm_dtype):
    # fc1 + ReLU  (matmul operands in mm_dtype, accumulate + elementwise in f32)
    h1 = jnp.dot(x_ref[...].astype(mm_dtype), w1_ref[...],
                 preferred_element_type=jnp.float32)
    h1 = jnp.maximum(h1 + b1_ref[...], 0.0)
    # fc2 + ReLU
    h2 = jnp.dot(h1.astype(mm_dtype), w2_ref[...],
                 preferred_element_type=jnp.float32)
    h2 = jnp.maximum(h2 + b2_ref[...], 0.0)
    # fc3 + tanh
    h3 = jnp.dot(h2.astype(mm_dtype), w3_ref[...],
                 preferred_element_type=jnp.float32)
    o_ref[...] = jnp.tanh(h3 + b3_ref[...]).astype(o_ref.dtype)


def init_actor_params(key, space_states_dim, space_actions_dim,
                      layer1_size=300, layer2_size=200):
    """Deterministic init mimicking nn.Linear default (U[-1/sqrt(fan_in), +])."""
    def linear(k, fan_in, fan_out):
        kw, kb = jax.random.split(k)
        bound = 1.0 / jnp.sqrt(fan_in)
        w = jax.random.uniform(kw, (fan_in, fan_out), jnp.float32, -bound, bound)
        b = jax.random.uniform(kb, (1, fan_out), jnp.float32, -bound, bound)
        return w, b

    k1, k2, k3 = jax.random.split(key, 3)
    w1, b1 = linear(k1, space_states_dim, layer1_size)
    w2, b2 = linear(k2, layer1_size, layer2_size)
    w3, b3 = linear(k3, layer2_size, space_actions_dim)
    return {"w1": w1, "b1": b1, "w2": w2, "b2": b2, "w3": w3, "b3": b3}


def prepare_actor_params(params, mm_dtype=jnp.float32):
    """Pad hidden/output widths to 128-lane multiples with zeros (math-preserving
    because ReLU(0)=0 / tanh(0)=0) and cast matmul weights to `mm_dtype`.
    Do this once; reuse the padded params across calls."""
    w1, b1 = params["w1"], params["b1"]
    w2, b2 = params["w2"], params["b2"]
    w3, b3 = params["w3"], params["b3"]
    S, L1 = w1.shape
    _, L2 = w2.shape
    _, A = w3.shape
    L1p, L2p, Ap = _round_up(L1, LANE), _round_up(L2, LANE), _round_up(A, LANE)

    def pad2(x, rows, cols):
        return jnp.pad(x, ((0, rows - x.shape[0]), (0, cols - x.shape[1])))

    return {
        "w1": pad2(w1, S,   L1p).astype(mm_dtype),
        "b1": pad2(b1, 1,   L1p).astype(jnp.float32),
        "w2": pad2(w2, L1p, L2p).astype(mm_dtype),
        "b2": pad2(b2, 1,   L2p).astype(jnp.float32),
        "w3": pad2(w3, L2p, Ap).astype(mm_dtype),
        "b3": pad2(b3, 1,   Ap).astype(jnp.float32),
    }


def actor_forward(state, padded_params, action_dim, *, block_b=128):
    """state: (B, S) float32.  padded_params: output of prepare_actor_params.
    Returns (B, action_dim) float32."""
    w1, b1 = padded_params["w1"], padded_params["b1"]
    w2, b2 = padded_params["w2"], padded_params["b2"]
    w3, b3 = padded_params["w3"], padded_params["b3"]
    mm_dtype = w1.dtype

    B, S = state.shape
    L1p = w1.shape[1]
    L2p = w2.shape[1]
    Ap = w3.shape[1]

    # Batch tile: 128 rows (full MXU row tile) when the batch allows it; pad the
    # batch up so the grid divides evenly.
    tb = min(block_b, _round_up(B, 8))
    Bp = _round_up(B, tb)
    if Bp != B:
        state = jnp.pad(state, ((0, Bp - B), (0, 0)))
    grid = (Bp // tb,)

    kernel = functools.partial(actor_kernel, mm_dtype=mm_dtype)

    flops = 2 * Bp * (S * L1p + L1p * L2p + L2p * Ap)
    bytes_accessed = (
        Bp * S * state.dtype.itemsize
        + sum(int(a.size) * a.dtype.itemsize for a in (w1, b1, w2, b2, w3, b3))
        + Bp * Ap * 4)
    cost = pl.CostEstimate(flops=flops, transcendentals=Bp * Ap,
                           bytes_accessed=bytes_accessed)

    out = pl.pallas_call(
        kernel,
        out_shape=jax.ShapeDtypeStruct((Bp, Ap), jnp.float32),
        grid=grid,
        in_specs=[
            pl.BlockSpec((tb, S),    lambda i: (i, 0)),   # state: tiled over batch
            pl.BlockSpec((S, L1p),   lambda i: (0, 0)),   # weights stay VMEM-resident
            pl.BlockSpec((1, L1p),   lambda i: (0, 0)),
            pl.BlockSpec((L1p, L2p), lambda i: (0, 0)),
            pl.BlockSpec((1, L2p),   lambda i: (0, 0)),
            pl.BlockSpec((L2p, Ap),  lambda i: (0, 0)),
            pl.BlockSpec((1, Ap),    lambda i: (0, 0)),
        ],
        out_specs=pl.BlockSpec((tb, Ap), lambda i: (i, 0)),  # lane-dense 128-wide store
        compiler_params=pltpu.CompilerParams(
            dimension_semantics=("parallel",)),               # 2x on v7x, no-op v5e/v6e
        cost_estimate=cost,
    )(state, w1, b1, w2, b2, w3, b3)

    return out[:B, :action_dim]


def actor_reference(state, params):
    """Pure-JAX reference (unpadded, f32) for correctness checking."""
    h1 = jnp.maximum(state @ params["w1"] + params["b1"], 0.0)
    h2 = jnp.maximum(h1 @ params["w2"] + params["b2"], 0.0)
    return jnp.tanh(h2 @ params["w3"] + params["b3"])


if __name__ == "__main__":
    key = jax.random.PRNGKey(0)
    k_params, k_state = jax.random.split(key)

    BATCH = 256          # >=128: fills MXU row tiles; two 128-row tiles -> both v7x TCs
    STATE_DIM = 16       # space_states_dim
    ACTION_DIM = 4       # space_actions_dim
    L1, L2 = 300, 200    # module defaults

    params = init_actor_params(k_params, STATE_DIM, ACTION_DIM, L1, L2)
    state = jax.random.normal(k_state, (BATCH, STATE_DIM), jnp.float32)
    ref = actor_reference(state, params)

    # f32 matmul path: must match the reference tightly.
    padded_f32 = prepare_actor_params(params, mm_dtype=jnp.float32)
    out = actor_forward(state, padded_f32, ACTION_DIM)
    out = jax.block_until_ready(out)
    assert out.shape == (BATCH, ACTION_DIM)
    assert jnp.allclose(out, ref, atol=1e-5, rtol=1e-5), "f32 mismatch vs reference"

    # bf16 matmul-operand path: halves weight DMA bytes; elementwise stays f32.
    padded_bf16 = prepare_actor_params(params, mm_dtype=jnp.bfloat16)
    out_bf16 = actor_forward(state, padded_bf16, ACTION_DIM)
    out_bf16 = jax.block_until_ready(out_bf16)
    assert out_bf16.shape == (BATCH, ACTION_DIM)
    assert jnp.allclose(out_bf16, ref, atol=3e-2, rtol=3e-2), "bf16 mismatch vs reference"

    print("KERNEL_OK")
</pallas_src>

<mosaic_0001>
module attributes {stable_mosaic.version = 11 : i64} {
  func.func @actor_kernel(%arg0: i32, %arg1: memref<128x16xf32, #tpu.memory_space<vmem>>, %arg2: memref<16x384xf32, #tpu.memory_space<vmem>>, %arg3: memref<1x384xf32, #tpu.memory_space<vmem>>, %arg4: memref<384x256xf32, #tpu.memory_space<vmem>>, %arg5: memref<1x256xf32, #tpu.memory_space<vmem>>, %arg6: memref<256x128xf32, #tpu.memory_space<vmem>>, %arg7: memref<1x128xf32, #tpu.memory_space<vmem>>, %arg8: memref<128x128xf32, #tpu.memory_space<vmem>>) attributes {dimension_semantics = [#tpu.dimension_semantics<parallel>], iteration_bounds = array<i64: 2>, scalar_prefetch = 0 : i64, scratch_operands = 0 : i64, tpu.core_type = #tpu.core_type<tc>, window_params = [{transform_indices = @transform_0, window_bounds = array<i64: 128, 16>}, {pipeline_mode = #tpu.pipeline_mode<synchronous>, transform_indices = @transform_1, window_bounds = array<i64: 16, 384>}, {pipeline_mode = #tpu.pipeline_mode<synchronous>, transform_indices = @transform_2, window_bounds = array<i64: 1, 384>}, {pipeline_mode = #tpu.pipeline_mode<synchronous>, transform_indices = @transform_3, window_bounds = array<i64: 384, 256>}, {pipeline_mode = #tpu.pipeline_mode<synchronous>, transform_indices = @transform_4, window_bounds = array<i64: 1, 256>}, {pipeline_mode = #tpu.pipeline_mode<synchronous>, transform_indices = @transform_5, window_bounds = array<i64: 256, 128>}, {pipeline_mode = #tpu.pipeline_mode<synchronous>, transform_indices = @transform_6, window_bounds = array<i64: 1, 128>}, {transform_indices = @transform_7, window_bounds = array<i64: 128, 128>}]} {
    %c0 = arith.constant 0 : index
    %c0_0 = arith.constant 0 : index
    %0 = vector.load %arg1[%c0, %c0_0] : memref<128x16xf32, #tpu.memory_space<vmem>>, vector<128x16xf32>
    %c0_1 = arith.constant 0 : index
    %c0_2 = arith.constant 0 : index
    %1 = vector.load %arg2[%c0_1, %c0_2] : memref<16x384xf32, #tpu.memory_space<vmem>>, vector<16x384xf32>
    %cst = arith.constant dense<0.000000e+00> : vector<128x384xf32>
    %2 = tpu.matmul %0, %1, %cst {dimension_numbers = #tpu.dot_dimension_numbers<[1], [0], [0], [1], [0, 0, 1, 1], [], []>} : vector<128x16xf32>, vector<16x384xf32>, vector<128x384xf32> -> vector<128x384xf32>
    %c0_3 = arith.constant 0 : index
    %c0_4 = arith.constant 0 : index
    %3 = vector.load %arg3[%c0_3, %c0_4] : memref<1x384xf32, #tpu.memory_space<vmem>>, vector<1x384xf32>
    %4 = vector.broadcast %3 : vector<1x384xf32> to vector<128x384xf32>
    %5 = arith.addf %2, %4 : vector<128x384xf32>
    %cst_5 = arith.constant 0.000000e+00 : f32
    %6 = vector.broadcast %cst_5 : f32 to vector<128x384xf32>
    %7 = arith.maximumf %5, %6 : vector<128x384xf32>
    %c0_6 = arith.constant 0 : index
    %c0_7 = arith.constant 0 : index
    %8 = vector.load %arg4[%c0_6, %c0_7] : memref<384x256xf32, #tpu.memory_space<vmem>>, vector<384x256xf32>
    %cst_8 = arith.constant dense<0.000000e+00> : vector<128x256xf32>
    %9 = tpu.matmul %7, %8, %cst_8 {dimension_numbers = #tpu.dot_dimension_numbers<[1], [0], [0], [1], [0, 0, 1, 1], [], []>} : vector<128x384xf32>, vector<384x256xf32>, vector<128x256xf32> -> vector<128x256xf32>
    %c0_9 = arith.constant 0 : index
    %c0_10 = arith.constant 0 : index
    %10 = vector.load %arg5[%c0_9, %c0_10] : memref<1x256xf32, #tpu.memory_space<vmem>>, vector<1x256xf32>
    %11 = vector.broadcast %10 : vector<1x256xf32> to vector<128x256xf32>
    %12 = arith.addf %9, %11 : vector<128x256xf32>
    %cst_11 = arith.constant 0.000000e+00 : f32
    %13 = vector.broadcast %cst_11 : f32 to vector<128x256xf32>
    %14 = arith.maximumf %12, %13 : vector<128x256xf32>
    %c0_12 = arith.constant 0 : index
    %c0_13 = arith.constant 0 : index
    %15 = vector.load %arg6[%c0_12, %c0_13] : memref<256x128xf32, #tpu.memory_space<vmem>>, vector<256x128xf32>
    %cst_14 = arith.constant dense<0.000000e+00> : vector<128x128xf32>
    %16 = tpu.matmul %14, %15, %cst_14 {dimension_numbers = #tpu.dot_dimension_numbers<[1], [0], [0], [1], [0, 0, 1, 1], [], []>} : vector<128x256xf32>, vector<256x128xf32>, vector<128x128xf32> -> vector<128x128xf32>
    %c0_15 = arith.constant 0 : index
    %c0_16 = arith.constant 0 : index
    %17 = vector.load %arg7[%c0_15, %c0_16] : memref<1x128xf32, #tpu.memory_space<vmem>>, vector<1x128xf32>
    %18 = vector.broadcast %17 : vector<1x128xf32> to vector<128x128xf32>
    %19 = arith.addf %16, %18 : vector<128x128xf32>
    %20 = math.tanh %19 : vector<128x128xf32>
    %c0_17 = arith.constant 0 : index
    %c0_18 = arith.constant 0 : index
    %21 = vector.load %arg8[%c0_17, %c0_18] : memref<128x128xf32, #tpu.memory_space<vmem>>, vector<128x128xf32>
    tpu.vector_store %arg8[%c0_17, %c0_18], %20 {strides = array<i32>} : memref<128x128xf32, #tpu.memory_space<vmem>>, vector<128x128xf32>,
    return
  }
  func.func @transform_0(%arg0: i32) -> (i32, i32) {
    %c0_i32 = arith.constant 0 : i32
    %c0_i32_0 = arith.constant 0 : i32
    return %arg0, %c0_i32 : i32, i32
  }
  func.func @transform_1(%arg0: i32) -> (i32, i32) {
    %c0_i32 = arith.constant 0 : i32
    %c0_i32_0 = arith.constant 0 : i32
    %c0_i32_1 = arith.constant 0 : i32
    return %c0_i32, %c0_i32_0 : i32, i32
  }
  func.func @transform_2(%arg0: i32) -> (i32, i32) {
    %c0_i32 = arith.constant 0 : i32
    %c0_i32_0 = arith.constant 0 : i32
    %c0_i32_1 = arith.constant 0 : i32
    return %c0_i32, %c0_i32_0 : i32, i32
  }
  func.func @transform_3(%arg0: i32) -> (i32, i32) {
    %c0_i32 = arith.constant 0 : i32
    %c0_i32_0 = arith.constant 0 : i32
    %c0_i32_1 = arith.constant 0 : i32
    return %c0_i32, %c0_i32_0 : i32, i32
  }
  func.func @transform_4(%arg0: i32) -> (i32, i32) {
    %c0_i32 = arith.constant 0 : i32
    %c0_i32_0 = arith.constant 0 : i32
    %c0_i32_1 = arith.constant 0 : i32
    return %c0_i32, %c0_i32_0 : i32, i32
  }
  func.func @transform_5(%arg0: i32) -> (i32, i32) {
    %c0_i32 = arith.constant 0 : i32
    %c0_i32_0 = arith.constant 0 : i32
    %c0_i32_1 = arith.constant 0 : i32
    return %c0_i32, %c0_i32_0 : i32, i32
  }
  func.func @transform_6(%arg0: i32) -> (i32, i32) {
    %c0_i32 = arith.constant 0 : i32
    %c0_i32_0 = arith.constant 0 : i32
    %c0_i32_1 = arith.constant 0 : i32
    return %c0_i32, %c0_i32_0 : i32, i32
  }
  func.func @transform_7(%arg0: i32) -> (i32, i32) {
    %c0_i32 = arith.constant 0 : i32
    %c0_i32_0 = arith.constant 0 : i32
    return %arg0, %c0_i32 : i32, i32
  }
}

</mosaic_0001>

<llo_original>
// kernel: tpu_custom_call.1
$region0: #{tpu_custom_call.1}
  #allocation0 [shape = 'u32[]', space=smem, size = 0x4, offset = 0x4, fixed_abs, tag = 'smem constant byte address 0x4 - core index']
  #allocation1 [shape = 'u32[144,128]{1,0:T(1,128)}', space=vmem, size = 0x12000, scoped, tag = 'internal scratch']
  %s0 = inlined_call_operand.vmem [shape: f32[256,16], index: 0, kind: input, shape index: {}]
  %s1 = inlined_call_operand.vmem [shape: f32[16,384], index: 1, kind: input, shape index: {}]
  %s2 = inlined_call_operand.hbm [shape: f32[1,384], index: 2, kind: input, shape index: {}]
  %s3 = inlined_call_operand.hbm [shape: f32[384,256], index: 3, kind: input, shape index: {}]
  %s4 = inlined_call_operand.vmem [shape: f32[1,256], index: 4, kind: input, shape index: {}]
  %s5 = inlined_call_operand.vmem [shape: f32[256,128], index: 5, kind: input, shape index: {}]
  %s6 = inlined_call_operand.vmem [shape: f32[1,128], index: 6, kind: input, shape index: {}]
  %s7 = inlined_call_operand.hbm [shape: f32[256,128], index: 7, kind: output, shape index: {}]
  %s8 = sld [smem:[#allocation0]]
  $region69: #{tpu_custom_call.1} parent=0
    _
  %s10 = ssub.s32 1, %s8
  %s11 = scalar_select 0, %s10, %s8
  $region1: #{tpu_custom_call.1} parent=0
    #allocation2 [shape = 'u8[1536]{0}', space=vmem, size = 0x800, scoped, tag = 'input window, operand 2, single buffered']
    #allocation3 [shape = 's32[2]{0}', space=sflag, size = 0x8, scoped, tag = 'scoped memory for tpu_custom_call.1']
    #allocation4 [shape = 's32[2]{0}', space=sflag, size = 0x8, scoped, tag = 'scoped memory for tpu_custom_call.1']
    #allocation5 [shape = 'u8[393216]{0}', space=vmem, size = 0x60000, scoped, tag = 'input window, operand 3, single buffered']
    #allocation6 [shape = 's32[1]{0}', space=sflag, size = 0x4, scoped, tag = 'scoped memory for tpu_custom_call.1']
    #allocation7 [shape = 'u8[131072]{0}', space=vmem, size = 0x20000, scoped, tag = 'output window, operand 0']
    %12 = vsyncpa [#allocation3], 0
    %13 = vsyncpa [#allocation6], 0
    %14 = vsyncpa [#allocation4], 0
    %s15 = scalar_lea.sflag [#allocation4], 1
    %16 = vsyncpa %s15, 0
    loop: start=0, step=1, limit=4
    $region2: #{tpu_custom_call.1} parent=1 // loop_pre_header
      _
    $region3: #{tpu_custom_call.1} parent=1 // loop_header
      %s18 = sphi 0, %s22
      %p19 = scmp.ge.s32.totalorder %s18, 4
      %s28 = sphi 0, %s30
      %s31 = sphi 0, %s28
      %s32 = sphi 0, %s31
      %s48 = sphi 0, %s32
      %s52 = sphi 0, %s52
      %s54 = sphi 0, %s52
      %s55 = sphi 0, %s54
      %s69 = sphi 0, %s55
      %s73 = sphi 0, %s73
      %s75 = sphi 0, %s73
      %s76 = sphi 0, %s75
      %s90 = sphi 0, %s76
      %s94 = sphi 0, %s94
      %s96 = sphi 0, %s94
      %s97 = sphi 0, %s96
      %s111 = sphi 0, %s97
      %s115 = sphi 0, %s115
      %s117 = sphi 0, %s115
      %s118 = sphi 0, %s117
      %s132 = sphi 0, %s118
      %s136 = sphi 0, %s136
      %s138 = sphi 0, %s136
      %s139 = sphi 0, %s138
      %s153 = sphi 0, %s139
      %s157 = sphi 0, %s157
      %s159 = sphi 0, %s157
      %s160 = sphi 0, %s159
      %s174 = sphi 0, %s160
      %s180 = sphi 0, %s182
      %s183 = sphi 0, %s180
      %s184 = sphi 0, %s183
      %s200 = sphi 0, %s184
    $region4: #{tpu_custom_call.1} parent=1 // loop_header_branch
      %21 = sbr.rel (%p19) target = $region8
    $region5: #{tpu_custom_call.1} parent=1 // loop_body
      %s23 = ssub.s32 %s18, 1
      %s24 = ssub.s32 %s18, 2
      %s25 = sadd.s32 %s18, 1
      %s26 = ssub.s32 %s18, %s25
      %p27 = scmp.eq.s32.totalorder %s26, 0
      %s29 = sadd.s32 %s28, 1
      %s30 = scalar_select %p27, %s28, %s29
      %p33 = pneg %p27
      %p34 = scmp.eq.s32.totalorder %s18, 1
      %p35 = por %p33, %p34
      %p36 = scmp.ne.s32.totalorder %s28, %s31
      %p37 = scmp.eq.s32.totalorder %s18, 0
      %p38 = por %p36, %p37
      %p39 = scmp.ne.s32.totalorder %s28, %s31
      %p40 = scmp.eq.s32.totalorder %s23, 1
      %p41 = por %p39, %p40
      %p42 = scmp.ne.s32.totalorder %s31, %s32
      %p43 = scmp.eq.s32.totalorder %s23, 0
      %p44 = por %p42, %p43
      %p45 = scmp.ne.s32.totalorder %s31, %s32
      %p46 = scmp.eq.s32.totalorder %s24, 1
      %p47 = por %p45, %p46
      %p49 = scmp.ne.s32.totalorder %s32, %s48
      %p50 = scmp.eq.s32.totalorder %s24, 0
      %p51 = por %p49, %p50
      %s53 = sadd.s32 %s52, 1
      %p56 = scmp.eq.s32.totalorder %s18, 1
      %p57 = scmp.ne.s32.totalorder %s52, %s54
      %p58 = scmp.eq.s32.totalorder %s18, 0
      %p59 = por %p57, %p58
      %p60 = scmp.ne.s32.totalorder %s52, %s54
      %p61 = scmp.eq.s32.totalorder %s23, 1
      %p62 = por %p60, %p61
      %p63 = scmp.ne.s32.totalorder %s54, %s55
      %p64 = scmp.eq.s32.totalorder %s23, 0
      %p65 = por %p63, %p64
      %p66 = scmp.ne.s32.totalorder %s54, %s55
      %p67 = scmp.eq.s32.totalorder %s24, 1
      %p68 = por %p66, %p67
      %p70 = scmp.ne.s32.totalorder %s55, %s69
      %p71 = scmp.eq.s32.totalorder %s24, 0
      %p72 = por %p70, %p71
      %s74 = sadd.s32 %s73, 1
      %p77 = scmp.eq.s32.totalorder %s18, 1
      %p78 = scmp.ne.s32.totalorder %s73, %s75
      %p79 = scmp.eq.s32.totalorder %s18, 0
      %p80 = por %p78, %p79
      %p81 = scmp.ne.s32.totalorder %s73, %s75
      %p82 = scmp.eq.s32.totalorder %s23, 1
      %p83 = por %p81, %p82
      %p84 = scmp.ne.s32.totalorder %s75, %s76
      %p85 = scmp.eq.s32.totalorder %s23, 0
      %p86 = por %p84, %p85
      %p87 = scmp.ne.s32.totalorder %s75, %s76
      %p88 = scmp.eq.s32.totalorder %s24, 1
      %p89 = por %p87, %p88
      %p91 = scmp.ne.s32.totalorder %s76, %s90
      %p92 = scmp.eq.s32.totalorder %s24, 0
      %p93 = por %p91, %p92
      %s95 = sadd.s32 %s94, 1
      %p98 = scmp.eq.s32.totalorder %s18, 1
      %p99 = scmp.ne.s32.totalorder %s94, %s96
      %p100 = scmp.eq.s32.totalorder %s18, 0
      %p101 = por %p99, %p100
      %p102 = scmp.ne.s32.totalorder %s94, %s96
      %p103 = scmp.eq.s32.totalorder %s23, 1
      %p104 = por %p102, %p103
      %p105 = scmp.ne.s32.totalorder %s96, %s97
      %p106 = scmp.eq.s32.totalorder %s23, 0
      %p107 = por %p105, %p106
      %p108 = scmp.ne.s32.totalorder %s96, %s97
      %p109 = scmp.eq.s32.totalorder %s24, 1
      %p110 = por %p108, %p109
      %p112 = scmp.ne.s32.totalorder %s97, %s111
      %p113 = scmp.eq.s32.totalorder %s24, 0
      %p114 = por %p112, %p113
      %s116 = sadd.s32 %s115, 1
      %p119 = scmp.eq.s32.totalorder %s18, 1
      %p120 = scmp.ne.s32.totalorder %s115, %s117
      %p121 = scmp.eq.s32.totalorder %s18, 0
      %p122 = por %p120, %p121
      %p123 = scmp.ne.s32.totalorder %s115, %s117
      %p124 = scmp.eq.s32.totalorder %s23, 1
      %p125 = por %p123, %p124
      %p126 = scmp.ne.s32.totalorder %s117, %s118
      %p127 = scmp.eq.s32.totalorder %s23, 0
      %p128 = por %p126, %p127
      %p129 = scmp.ne.s32.totalorder %s117, %s118
      %p130 = scmp.eq.s32.totalorder %s24, 1
      %p131 = por %p129, %p130
      %p133 = scmp.ne.s32.totalorder %s118, %s132
      %p134 = scmp.eq.s32.totalorder %s24, 0
      %p135 = por %p133, %p134
      %s137 = sadd.s32 %s136, 1
      %p140 = scmp.eq.s32.totalorder %s18, 1
      %p141 = scmp.ne.s32.totalorder %s136, %s138
      %p142 = scmp.eq.s32.totalorder %s18, 0
      %p143 = por %p141, %p142
      %p144 = scmp.ne.s32.totalorder %s136, %s138
      %p145 = scmp.eq.s32.totalorder %s23, 1
      %p146 = por %p144, %p145
      %p147 = scmp.ne.s32.totalorder %s138, %s139
      %p148 = scmp.eq.s32.totalorder %s23, 0
      %p149 = por %p147, %p148
      %p150 = scmp.ne.s32.totalorder %s138, %s139
      %p151 = scmp.eq.s32.totalorder %s24, 1
      %p152 = por %p150, %p151
      %p154 = scmp.ne.s32.totalorder %s139, %s153
      %p155 = scmp.eq.s32.totalorder %s24, 0
      %p156 = por %p154, %p155
      %s158 = sadd.s32 %s157, 1
      %p161 = scmp.eq.s32.totalorder %s18, 1
      %p162 = scmp.ne.s32.totalorder %s157, %s159
      %p163 = scmp.eq.s32.totalorder %s18, 0
      %p164 = por %p162, %p163
      %p165 = scmp.ne.s32.totalorder %s157, %s159
      %p166 = scmp.eq.s32.totalorder %s23, 1
      %p167 = por %p165, %p166
      %p168 = scmp.ne.s32.totalorder %s159, %s160
      %p169 = scmp.eq.s32.totalorder %s23, 0
      %p170 = por %p168, %p169
      %p171 = scmp.ne.s32.totalorder %s159, %s160
      %p172 = scmp.eq.s32.totalorder %s24, 1
      %p173 = por %p171, %p172
      %p175 = scmp.ne.s32.totalorder %s160, %s174
      %p176 = scmp.eq.s32.totalorder %s24, 0
      %p177 = por %p175, %p176
      %s178 = ssub.s32 %s18, %s25
      %p179 = scmp.eq.s32.totalorder %s178, 0
      %s181 = sadd.s32 %s180, 1
      %s182 = scalar_select %p179, %s180, %s181
      %p185 = pneg %p179
      %p186 = scmp.eq.s32.totalorder %s18, 1
      %p187 = por %p185, %p186
      %p188 = scmp.ne.s32.totalorder %s180, %s183
      %p189 = scmp.eq.s32.totalorder %s18, 0
      %p190 = por %p188, %p189
      %p191 = scmp.ne.s32.totalorder %s180, %s183
      %p192 = scmp.eq.s32.totalorder %s23, 1
      %p193 = por %p191, %p192
      %p194 = scmp.ne.s32.totalorder %s183, %s184
      %p195 = scmp.eq.s32.totalorder %s23, 0
      %p196 = por %p194, %p195
      %p197 = scmp.ne.s32.totalorder %s183, %s184
      %p198 = scmp.eq.s32.totalorder %s24, 1
      %p199 = por %p197, %p198
      %p201 = scmp.ne.s32.totalorder %s184, %s200
      %p202 = scmp.eq.s32.totalorder %s24, 0
      %p203 = por %p201, %p202
      %p204 = scmp.le.s32.totalorder 1, %s18
      %p205 = scmp.lt.s32.totalorder %s18, 3
      %p206 = pnand %p204, %p205
      %p207 = pneg %p206
      // Predicated region
      $region9: #{tpu_custom_call.1} parent=5 // pred_check
        _
      $region10: #{tpu_custom_call.1} parent=5 // pred_check_branch
        %209 = sbr.rel (%p206) target = $region12
      $region11: #{tpu_custom_call.1} parent=5 // pred_region
        %s210 = ssub.s32 %s18, 1
        // Predicated region
        $region13: #{tpu_custom_call.1} parent=11 // pred_check
          %p211 = pneg %p65
        $region14: #{tpu_custom_call.1} parent=11 // pred_check_branch
          %213 = sbr.rel (%p211) target = $region16
        $region15: #{tpu_custom_call.1} parent=11 // pred_region
          _
        $region16: #{tpu_custom_call.1} parent=11 // pred_fallthru
          _
        // Predicated region
        $region17: #{tpu_custom_call.1} parent=11 // pred_check
          %p214 = pneg %p86
        $region18: #{tpu_custom_call.1} parent=11 // pred_check_branch
          %216 = sbr.rel (%p214) target = $region20
        $region19: #{tpu_custom_call.1} parent=11 // pred_region
          %s218 = ssub.s32 48, 48
          %219 = vsyncadd [#allocation3], %s218
          %s221 = sshll.u32 [#allocation2], 4
          %s222 = int_to_ptr.vmem [resolvable:$true] %s221
          %224 = dma.hbm_to_vmem [thread:$0]  %s2, 48, %s222, [#allocation3]
        $region20: #{tpu_custom_call.1} parent=11 // pred_fallthru
          _
        // Predicated region
        $region21: #{tpu_custom_call.1} parent=11 // pred_check
          %p225 = pneg %p107
        $region22: #{tpu_custom_call.1} parent=11 // pred_check_branch
          %227 = sbr.rel (%p225) target = $region24
        $region23: #{tpu_custom_call.1} parent=11 // pred_region
          %s229 = ssub.s32 12288, 12288
          %230 = vsyncadd [#allocation6], %s229
          %s231 = sshll.u32 [#allocation5], 4
          %s232 = int_to_ptr.vmem [resolvable:$true] %s231
          %237 = dma.hbm_to_vmem [thread:$0]  %s3, 12288, %s232, [#allocation6], 256, 256, 16
        $region24: #{tpu_custom_call.1} parent=11 // pred_fallthru
          _
        // Predicated region
        $region25: #{tpu_custom_call.1} parent=11 // pred_check
          %p238 = pneg %p128
        $region26: #{tpu_custom_call.1} parent=11 // pred_check_branch
          %240 = sbr.rel (%p238) target = $region28
        $region27: #{tpu_custom_call.1} parent=11 // pred_region
          _
        $region28: #{tpu_custom_call.1} parent=11 // pred_fallthru
          _
        // Predicated region
        $region29: #{tpu_custom_call.1} parent=11 // pred_check
          %p241 = pneg %p149
        $region30: #{tpu_custom_call.1} parent=11 // pred_check_branch
          %243 = sbr.rel (%p241) target = $region32
        $region31: #{tpu_custom_call.1} parent=11 // pred_region
          _
        $region32: #{tpu_custom_call.1} parent=11 // pred_fallthru
          _
        // Predicated region
        $region33: #{tpu_custom_call.1} parent=11 // pred_check
          %p244 = pneg %p170
        $region34: #{tpu_custom_call.1} parent=11 // pred_check_branch
          %246 = sbr.rel (%p244) target = $region36
        $region35: #{tpu_custom_call.1} parent=11 // pred_region
          _
        $region36: #{tpu_custom_call.1} parent=11 // pred_fallthru
          _
      $region12: #{tpu_custom_call.1} parent=5 // pred_fallthru
        _
      %p247 = scmp.lt.s32.totalorder %s18, 2
      // Predicated region
      $region37: #{tpu_custom_call.1} parent=5 // pred_check
        %p248 = pneg %p247
      $region38: #{tpu_custom_call.1} parent=5 // pred_check_branch
        %250 = sbr.rel (%p248) target = $region40
      $region39: #{tpu_custom_call.1} parent=5 // pred_region
        // Predicated region
        $region41: #{tpu_custom_call.1} parent=39 // pred_check
          %p251 = pneg %p38
        $region42: #{tpu_custom_call.1} parent=39 // pred_check_branch
          %253 = sbr.rel (%p251) target = $region44
        $region43: #{tpu_custom_call.1} parent=39 // pred_region
          %s254 = smul.u32 16, %s18
          %p255 = scmp.lt.s32.totalorder %s254, 31
          %s256 = scalar_select %p255, %s254, 31
          %s257 = smul.addr %s256, 8
          %s258 = scalar_lea.vmem %s0, %s257
          %s259 = smul.u32 16, %s18
        $region44: #{tpu_custom_call.1} parent=39 // pred_fallthru
          _
      $region40: #{tpu_custom_call.1} parent=5 // pred_fallthru
        _
      %p260 = scmp.le.s32.totalorder 1, %s18
      %p261 = scmp.lt.s32.totalorder %s18, 3
      %p262 = pnand %p260, %p261
      %p263 = pneg %p262
      // Predicated region
      $region45: #{tpu_custom_call.1} parent=5 // pred_check
        _
      $region46: #{tpu_custom_call.1} parent=5 // pred_check_branch
        %265 = sbr.rel (%p262) target = $region48
      $region47: #{tpu_custom_call.1} parent=5 // pred_region
        %s266 = ssub.s32 %s18, 1
        // Predicated region
        $region49: #{tpu_custom_call.1} parent=47 // pred_check
          %p267 = pneg %p86
        $region50: #{tpu_custom_call.1} parent=47 // pred_check_branch
          %269 = sbr.rel (%p267) target = $region52
        $region51: #{tpu_custom_call.1} parent=47 // pred_region
          %270 = dma.done [#allocation3], 48
        $region52: #{tpu_custom_call.1} parent=47 // pred_fallthru
          _
        // Predicated region
        $region53: #{tpu_custom_call.1} parent=47 // pred_check
          %p271 = pneg %p107
        $region54: #{tpu_custom_call.1} parent=47 // pred_check_branch
          %273 = sbr.rel (%p271) target = $region56
        $region55: #{tpu_custom_call.1} parent=47 // pred_region
          %274 = dma.done [#allocation6], 12288
        $region56: #{tpu_custom_call.1} parent=47 // pred_fallthru
          _
        %s275 = smul.u32 16, %s23
        %p276 = scmp.lt.s32.totalorder %s275, 31
        %s277 = scalar_select %p276, %s275, 31
        %s278 = smul.addr %s277, 8
        %s279 = scalar_lea.vmem %s0, %s278
        %p280 = pneg %p44
        %p281 = pneg %p41
        %p282 = pneg %p65
        %p283 = pneg %p62
        %p284 = pneg %p86
        %p285 = pneg %p83
        %p286 = pneg %p107
        %p287 = pneg %p104
        %p288 = pneg %p128
        %p289 = pneg %p125
        %p290 = pneg %p149
        %p291 = pneg %p146
        %p292 = pneg %p170
        %p293 = pneg %p167
        %p294 = pneg %p196
        %p295 = pneg %p193
        %s296 = sand.u32 %s183, 1
        %s297 = scalar_lea.sflag [#allocation4], %s296
        %s298 = sand.u32 %s183, 1
        %s299 = smul.addr %s298, 128
        %s300 = scalar_lea.vmem [#allocation7], %s299
        %s301 = smul.u32 16, %s23
        %p302 = scmp.lt.s32.totalorder %s301, 31
        %s303 = scalar_select %p302, %s301, 31
        %s304 = smul.addr %s303, 8
        %s305 = scalar_lea.vmem %s0, %s304
        %s306 = smul.u32 16, %s23
        %s307 = smul.u32 16, %s23
        %v308 = vld [vmem:[%s305] sm:$0xff]
        %v309 = vld [vmem:[%s305 + $0x8] sm:$0xff]
        %v310 = vld [vmem:[%s305 + $0x10] sm:$0xff]
        %v311 = vld [vmem:[%s305 + $0x18] sm:$0xff]
        %v312 = vld [vmem:[%s305 + $0x20] sm:$0xff]
        %v313 = vld [vmem:[%s305 + $0x28] sm:$0xff]
        %v314 = vld [vmem:[%s305 + $0x30] sm:$0xff]
        %v315 = vld [vmem:[%s305 + $0x38] sm:$0xff]
        %v316 = vld [vmem:[%s305 + $0x40] sm:$0xff]
        %v317 = vld [vmem:[%s305 + $0x48] sm:$0xff]
        %v318 = vld [vmem:[%s305 + $0x50] sm:$0xff]
        %v319 = vld [vmem:[%s305 + $0x58] sm:$0xff]
        %v320 = vld [vmem:[%s305 + $0x60] sm:$0xff]
        %v321 = vld [vmem:[%s305 + $0x68] sm:$0xff]
        %v322 = vld [vmem:[%s305 + $0x70] sm:$0xff]
        %v323 = vld [vmem:[%s305 + $0x78] sm:$0xff]
        %v324 = vld [vmem:[%s1] sm:$0xff]
        %v325 = vld [vmem:[%s1 + $0x8] sm:$0xff]
        %v326 = vld [vmem:[%s1 + $0x10] sm:$0xff]
        %v327 = vld [vmem:[%s1 + $0x18] sm:$0xff]
        %v328 = vld [vmem:[%s1 + $0x20] sm:$0xff]
        %v329 = vld [vmem:[%s1 + $0x28] sm:$0xff]
        %v330 = vld [vmem:[#allocation2] sm:$0x7]
        %v332 = vlaneseq
        %v333 = vshrl.u32 %v332, 7
        %v334 = vsub.s32 0, %v333
        %v335 = vrot.slane %v330, %v334
        %v336 = vlaneseq
        %v337 = vshrl.u32 %v336, 7
        %v338 = vsub.s32 1, %v337
        %v339 = vrot.slane %v330, %v338
        %v340 = vlaneseq
        %v341 = vshrl.u32 %v340, 7
        %v342 = vsub.s32 2, %v341
        %v343 = vrot.slane %v330, %v342
        %vm347 = vcmask 130048
        %v349 = vsel %vm347, %v308, 0
        %v352 = vsel %vm347, %v309, 0
        %v355 = vsel %vm347, %v310, 0
        %v358 = vsel %vm347, %v311, 0
        %v361 = vsel %vm347, %v312, 0
        %v364 = vsel %vm347, %v313, 0
        %v367 = vsel %vm347, %v314, 0
        %v370 = vsel %vm347, %v315, 0
        %v373 = vsel %vm347, %v316, 0
        %v376 = vsel %vm347, %v317, 0
        %v379 = vsel %vm347, %v318, 0
        %v382 = vsel %vm347, %v319, 0
        %v385 = vsel %vm347, %v320, 0
        %v388 = vsel %vm347, %v321, 0
        %v391 = vsel %vm347, %v322, 0
        %v394 = vsel %vm347, %v323, 0
        %396 = vmatprep.subr.mxu0 %v325
        %397 = vmatpush1.msra.mxu0 %v324
        %398 = vmatprep.subr.mxu0 %v328
        %399 = vmatpush1.msra.mxu0 %v327
        %400 = vmatprep.subr.mxu0 0.0
        %401 = vmatpush1.msra.mxu0 0.0
        %402 = vmatprep.subr.mxu0 0.0
        %403 = vmatpush1.msra.mxu0 0.0
        %404 = vmatprep.subr.mxu0 0.0
        %405 = vmatpush1.msra.mxu0 0.0
        %406 = vmatprep.subr.mxu0 0.0
        %407 = vmatpush1.msra.mxu0 0.0
        %408 = vmatprep.subr.mxu0 0.0
        %409 = vmatpush1.msra.mxu0 0.0
        %410 = vmatprep.subr.mxu0 0.0
        %411 = vmatpush1.msra.mxu0 0.0
        %412 = vmatprep.subr.mxu0 0.0
        %413 = vmatpush1.msra.mxu0 0.0
        %414 = vmatprep.subr.mxu0 0.0
        %415 = vmatpush1.msra.mxu0 0.0
        %416 = vmatprep.subr.mxu0 0.0
        %417 = vmatpush1.msra.mxu0 0.0
        %418 = vmatprep.subr.mxu0 0.0
        %419 = vmatpush1.msra.mxu0 0.0
        %420 = vmatprep.subr.mxu0 0.0
        %421 = vmatpush1.msra.mxu0 0.0
        %422 = vmatprep.subr.mxu0 0.0
        %423 = vmatpush1.msra.mxu0 0.0
        %424 = vmatprep.subr.mxu0 0.0
        %425 = vmatpush1.msra.mxu0 0.0
        %426 = vmatprep.subr.mxu0 0.0
        %427 = vmatpush1.msra.mxu0 0.0
        %428 = vmatprep.subr.mxu0 0.0
        %429 = vmatpush1.msra.mxu0 0.0
        %430 = vmatprep.subr.mxu0 0.0
        %431 = vmatpush1.msra.mxu0 0.0
        %432 = vmatprep.subr.mxu0 0.0
        %433 = vmatpush1.msra.mxu0 0.0
        %434 = vmatprep.subr.mxu0 0.0
        %435 = vmatpush1.msra.mxu0 0.0
        %436 = vmatprep.subr.mxu0 0.0
        %437 = vmatpush1.msra.mxu0 0.0
        %438 = vmatprep.subr.mxu0 0.0
        %439 = vmatpush1.msra.mxu0 0.0
        %440 = vmatprep.subr.mxu0 0.0
        %441 = vmatpush1.msra.mxu0 0.0
        %442 = vmatprep.subr.mxu0 0.0
        %443 = vmatpush1.msra.mxu0 0.0
        %444 = vmatprep.subr.mxu0 0.0
        %445 = vmatpush1.msra.mxu0 0.0
        %446 = vmatprep.subr.mxu0 0.0
        %447 = vmatpush1.msra.mxu0 0.0
        %448 = vmatprep.subr.mxu0 0.0
        %449 = vmatpush1.msra.mxu0 0.0
        %450 = vmatprep.subr.mxu0 0.0
        %451 = vmatpush1.msra.mxu0 0.0
        %452 = vmatprep.subr.mxu0 0.0
        %453 = vmatpush1.msra.mxu0 0.0
        %454 = vmatprep.subr.mxu0 0.0
        %455 = vmatpush1.msra.mxu0 0.0
        %456 = vmatprep.subr.mxu0 0.0
        %457 = vmatpush1.msra.mxu0 0.0
        %458 = vmatprep.subr.mxu0 0.0
        %459 = vmatpush1.msra.mxu0 0.0
        %460 = vmatprep.mubr.f32.mxu0 0.0
        %461 = vmatmul.mubr.f32.gmra.mrb[0].mxu0 %v349
        %v462 = vpop.f32.mrb[0].mxu0
        %v463 = vadd.f32 %v335, %v462
        %v464 = vpop.f32.mrb[0].mxu0
        %v465 = vadd.f32 %v339, %v464
        %466 = vmatprep.mubr.f32.mxu0 0.0
        %467 = vmatmul.mubr.f32.gmra.mrb[0].mxu0 %v352
        %v468 = vpop.f32.mrb[0].mxu0
        %v469 = vadd.f32 %v335, %v468
        %v470 = vpop.f32.mrb[0].mxu0
        %v471 = vadd.f32 %v339, %v470
        %472 = vmatprep.mubr.f32.mxu0 0.0
        %473 = vmatmul.mubr.f32.gmra.mrb[0].mxu0 %v355
        %v474 = vpop.f32.mrb[0].mxu0
        %v475 = vadd.f32 %v335, %v474
        %v476 = vpop.f32.mrb[0].mxu0
        %v477 = vadd.f32 %v339, %v476
        %478 = vmatprep.mubr.f32.mxu0 0.0
        %479 = vmatmul.mubr.f32.gmra.mrb[0].mxu0 %v358
        %v480 = vpop.f32.mrb[0].mxu0
        %v481 = vadd.f32 %v335, %v480
        %v482 = vpop.f32.mrb[0].mxu0
        %v483 = vadd.f32 %v339, %v482
        %484 = vmatprep.mubr.f32.mxu0 0.0
        %485 = vmatmul.mubr.f32.gmra.mrb[0].mxu0 %v361
        %v486 = vpop.f32.mrb[0].mxu0
        %v487 = vadd.f32 %v335, %v486
        %v488 = vpop.f32.mrb[0].mxu0
        %v489 = vadd.f32 %v339, %v488
        %490 = vmatprep.mubr.f32.mxu0 0.0
        %491 = vmatmul.mubr.f32.gmra.mrb[0].mxu0 %v364
        %v492 = vpop.f32.mrb[0].mxu0
        %v493 = vadd.f32 %v335, %v492
        %v494 = vpop.f32.mrb[0].mxu0
        %v495 = vadd.f32 %v339, %v494
        %496 = vmatprep.mubr.f32.mxu0 0.0
        %497 = vmatmul.mubr.f32.gmra.mrb[0].mxu0 %v367
        %v498 = vpop.f32.mrb[0].mxu0
        %v499 = vadd.f32 %v335, %v498
        %v500 = vpop.f32.mrb[0].mxu0
        %v501 = vadd.f32 %v339, %v500
        %502 = vmatprep.mubr.f32.mxu0 0.0
        %503 = vmatmul.mubr.f32.gmra.mrb[0].mxu0 %v370
        %v504 = vpop.f32.mrb[0].mxu0
        %v505 = vadd.f32 %v335, %v504
        %v506 = vpop.f32.mrb[0].mxu0
        %v507 = vadd.f32 %v339, %v506
        %508 = vmatprep.mubr.f32.mxu0 0.0
        %509 = vmatmul.mubr.f32.gmra.mrb[0].mxu0 %v373
        %v510 = vpop.f32.mrb[0].mxu0
        %v511 = vadd.f32 %v335, %v510
        %v512 = vpop.f32.mrb[0].mxu0
        %v513 = vadd.f32 %v339, %v512
        %514 = vmatprep.mubr.f32.mxu0 0.0
        %515 = vmatmul.mubr.f32.gmra.mrb[0].mxu0 %v376
        %v516 = vpop.f32.mrb[0].mxu0
        %v517 = vadd.f32 %v335, %v516
        %v518 = vpop.f32.mrb[0].mxu0
        %v519 = vadd.f32 %v339, %v518
        %520 = vmatprep.mubr.f32.mxu0 0.0
        %521 = vmatmul.mubr.f32.gmra.mrb[0].mxu0 %v379
        %v522 = vpop.f32.mrb[0].mxu0
        %v523 = vadd.f32 %v335, %v522
        %v524 = vpop.f32.mrb[0].mxu0
        %v525 = vadd.f32 %v339, %v524
        %526 = vmatprep.mubr.f32.mxu0 0.0
        %527 = vmatmul.mubr.f32.gmra.mrb[0].mxu0 %v382
        %v528 = vpop.f32.mrb[0].mxu0
        %v529 = vadd.f32 %v335, %v528
        %v530 = vpop.f32.mrb[0].mxu0
        %v531 = vadd.f32 %v339, %v530
        %532 = vmatprep.mubr.f32.mxu0 0.0
        %533 = vmatmul.mubr.f32.gmra.mrb[0].mxu0 %v385
        %v534 = vpop.f32.mrb[0].mxu0
        %v535 = vadd.f32 %v335, %v534
        %v536 = vpop.f32.mrb[0].mxu0
        %v537 = vadd.f32 %v339, %v536
        %538 = vmatprep.mubr.f32.mxu0 0.0
        %539 = vmatmul.mubr.f32.gmra.mrb[0].mxu0 %v388
        %v540 = vpop.f32.mrb[0].mxu0
        %v541 = vadd.f32 %v335, %v540
        %v542 = vpop.f32.mrb[0].mxu0
        %v543 = vadd.f32 %v339, %v542
        %544 = vmatprep.mubr.f32.mxu0 0.0
        %545 = vmatmul.mubr.f32.gmra.mrb[0].mxu0 %v391
        %v546 = vpop.f32.mrb[0].mxu0
        %v547 = vadd.f32 %v335, %v546
        %v548 = vpop.f32.mrb[0].mxu0
        %v549 = vadd.f32 %v339, %v548
        %550 = vmatprep.mubr.f32.mxu0 0.0
        %551 = vmatmul.mubr.f32.gmra.mrb[0].mxu0 %v394
        %v552 = vpop.f32.mrb[0].mxu0
        %v553 = vadd.f32 %v335, %v552
        %v554 = vpop.f32.mrb[0].mxu0
        %v555 = vadd.f32 %v339, %v554
        %556 = vdwg.mxu0
        %557 = vmatprep.subr.mxu0 0.0
        %558 = vmatpush1.msra.mxu0 %v326
        %559 = vmatprep.subr.mxu0 0.0
        %560 = vmatpush1.msra.mxu0 %v329
        %561 = vmatprep.subr.mxu0 0.0
        %562 = vmatpush1.msra.mxu0 0.0
        %563 = vmatprep.subr.mxu0 0.0
        %564 = vmatpush1.msra.mxu0 0.0
        %565 = vmatprep.subr.mxu0 0.0
        %566 = vmatpush1.msra.mxu0 0.0
        %567 = vmatprep.subr.mxu0 0.0
        %568 = vmatpush1.msra.mxu0 0.0
        %569 = vmatprep.subr.mxu0 0.0
        %570 = vmatpush1.msra.mxu0 0.0
        %571 = vmatprep.subr.mxu0 0.0
        %572 = vmatpush1.msra.mxu0 0.0
        %573 = vmatprep.subr.mxu0 0.0
        %574 = vmatpush1.msra.mxu0 0.0
        %575 = vmatprep.subr.mxu0 0.0
        %576 = vmatpush1.msra.mxu0 0.0
        %577 = vmatprep.subr.mxu0 0.0
        %578 = vmatpush1.msra.mxu0 0.0
        %579 = vmatprep.subr.mxu0 0.0
        %580 = vmatpush1.msra.mxu0 0.0
        %581 = vmatprep.subr.mxu0 0.0
        %582 = vmatpush1.msra.mxu0 0.0
        %583 = vmatprep.subr.mxu0 0.0
        %584 = vmatpush1.msra.mxu0 0.0
        %585 = vmatprep.subr.mxu0 0.0
        %586 = vmatpush1.msra.mxu0 0.0
        %587 = vmatprep.subr.mxu0 0.0
        %588 = vmatpush1.msra.mxu0 0.0
        %589 = vmatprep.subr.mxu0 0.0
        %590 = vmatpush1.msra.mxu0 0.0
        %591 = vmatprep.subr.mxu0 0.0
        %592 = vmatpush1.msra.mxu0 0.0
        %593 = vmatprep.subr.mxu0 0.0
        %594 = vmatpush1.msra.mxu0 0.0
        %595 = vmatprep.subr.mxu0 0.0
        %596 = vmatpush1.msra.mxu0 0.0
        %597 = vmatprep.subr.mxu0 0.0
        %598 = vmatpush1.msra.mxu0 0.0
        %599 = vmatprep.subr.mxu0 0.0
        %600 = vmatpush1.msra.mxu0 0.0
        %601 = vmatprep.subr.mxu0 0.0
        %602 = vmatpush1.msra.mxu0 0.0
        %603 = vmatprep.subr.mxu0 0.0
        %604 = vmatpush1.msra.mxu0 0.0
        %605 = vmatprep.subr.mxu0 0.0
        %606 = vmatpush1.msra.mxu0 0.0
        %607 = vmatprep.subr.mxu0 0.0
        %608 = vmatpush1.msra.mxu0 0.0
        %609 = vmatprep.subr.mxu0 0.0
        %610 = vmatpush1.msra.mxu0 0.0
        %611 = vmatprep.subr.mxu0 0.0
        %612 = vmatpush1.msra.mxu0 0.0
        %613 = vmatprep.subr.mxu0 0.0
        %614 = vmatpush1.msra.mxu0 0.0
        %615 = vmatprep.subr.mxu0 0.0
        %616 = vmatpush1.msra.mxu0 0.0
        %617 = vmatprep.subr.mxu0 0.0
        %618 = vmatpush1.msra.mxu0 0.0
        %619 = vmatprep.subr.mxu0 0.0
        %620 = vmatpush1.msra.mxu0 0.0
        %621 = vmatprep.mubr.f32.mxu0 0.0
        %622 = vmatmul.mubr.f32.gmra.mrb[0].mxu0 %v349
        %v623 = vpop.f32.mrb[0].mxu0
        %v624 = vadd.f32 %v343, %v623
        %v625 = vpop.f32.mrb[0].mxu0
        %626 = vmatprep.mubr.f32.mxu0 0.0
        %627 = vmatmul.mubr.f32.gmra.mrb[0].mxu0 %v352
        %v628 = vpop.f32.mrb[0].mxu0
        %v629 = vadd.f32 %v343, %v628
        %v630 = vpop.f32.mrb[0].mxu0
        %631 = vmatprep.mubr.f32.mxu0 0.0
        %632 = vmatmul.mubr.f32.gmra.mrb[0].mxu0 %v355
        %v633 = vpop.f32.mrb[0].mxu0
        %v634 = vadd.f32 %v343, %v633
        %v635 = vpop.f32.mrb[0].mxu0
        %636 = vmatprep.mubr.f32.mxu0 0.0
        %637 = vmatmul.mubr.f32.gmra.mrb[0].mxu0 %v358
        %v638 = vpop.f32.mrb[0].mxu0
        %v639 = vadd.f32 %v343, %v638
        %v640 = vpop.f32.mrb[0].mxu0
        %641 = vmatprep.mubr.f32.mxu0 0.0
        %642 = vmatmul.mubr.f32.gmra.mrb[0].mxu0 %v361
        %v643 = vpop.f32.mrb[0].mxu0
        %v644 = vadd.f32 %v343, %v643
        %v645 = vpop.f32.mrb[0].mxu0
        %646 = vmatprep.mubr.f32.mxu0 0.0
        %647 = vmatmul.mubr.f32.gmra.mrb[0].mxu0 %v364
        %v648 = vpop.f32.mrb[0].mxu0
        %v649 = vadd.f32 %v343, %v648
        %v650 = vpop.f32.mrb[0].mxu0
        %651 = vmatprep.mubr.f32.mxu0 0.0
        %652 = vmatmul.mubr.f32.gmra.mrb[0].mxu0 %v367
        %v653 = vpop.f32.mrb[0].mxu0
        %v654 = vadd.f32 %v343, %v653
        %v655 = vpop.f32.mrb[0].mxu0
        %656 = vmatprep.mubr.f32.mxu0 0.0
        %657 = vmatmul.mubr.f32.gmra.mrb[0].mxu0 %v370
        %v658 = vpop.f32.mrb[0].mxu0
        %v659 = vadd.f32 %v343, %v658
        %v660 = vpop.f32.mrb[0].mxu0
        %661 = vmatprep.mubr.f32.mxu0 0.0
        %662 = vmatmul.mubr.f32.gmra.mrb[0].mxu0 %v373
        %v663 = vpop.f32.mrb[0].mxu0
        %v664 = vadd.f32 %v343, %v663
        %v665 = vpop.f32.mrb[0].mxu0
        %666 = vmatprep.mubr.f32.mxu0 0.0
        %667 = vmatmul.mubr.f32.gmra.mrb[0].mxu0 %v376
        %v668 = vpop.f32.mrb[0].mxu0
        %v669 = vadd.f32 %v343, %v668
        %v670 = vpop.f32.mrb[0].mxu0
        %671 = vmatprep.mubr.f32.mxu0 0.0
        %672 = vmatmul.mubr.f32.gmra.mrb[0].mxu0 %v379
        %v673 = vpop.f32.mrb[0].mxu0
        %v674 = vadd.f32 %v343, %v673
        %v675 = vpop.f32.mrb[0].mxu0
        %676 = vmatprep.mubr.f32.mxu0 0.0
        %677 = vmatmul.mubr.f32.gmra.mrb[0].mxu0 %v382
        %v678 = vpop.f32.mrb[0].mxu0
        %v679 = vadd.f32 %v343, %v678
        %v680 = vpop.f32.mrb[0].mxu0
        %681 = vmatprep.mubr.f32.mxu0 0.0
        %682 = vmatmul.mubr.f32.gmra.mrb[0].mxu0 %v385
        %v683 = vpop.f32.mrb[0].mxu0
        %v684 = vadd.f32 %v343, %v683
        %v685 = vpop.f32.mrb[0].mxu0
        %686 = vmatprep.mubr.f32.mxu0 0.0
        %687 = vmatmul.mubr.f32.gmra.mrb[0].mxu0 %v388
        %v688 = vpop.f32.mrb[0].mxu0
        %v689 = vadd.f32 %v343, %v688
        %v690 = vpop.f32.mrb[0].mxu0
        %691 = vmatprep.mubr.f32.mxu0 0.0
        %692 = vmatmul.mubr.f32.gmra.mrb[0].mxu0 %v391
        %v693 = vpop.f32.mrb[0].mxu0
        %v694 = vadd.f32 %v343, %v693
        %v695 = vpop.f32.mrb[0].mxu0
        %696 = vmatprep.mubr.f32.mxu0 0.0
        %697 = vmatmul.mubr.f32.gmra.mrb[0].mxu0 %v394
        %v698 = vpop.f32.mrb[0].mxu0
        %v699 = vadd.f32 %v343, %v698
        %v700 = vpop.f32.mrb[0].mxu0
        %701 = vdwg.mxu0
        %v702 = vmax.f32 %v463, 0.0
        %v703 = vmax.f32 %v465, 0.0
        %v704 = vmax.f32 %v624, 0.0
        %v705 = vmax.f32 %v469, 0.0
        %v706 = vmax.f32 %v471, 0.0
        %v707 = vmax.f32 %v629, 0.0
        %v708 = vmax.f32 %v475, 0.0
        %v709 = vmax.f32 %v477, 0.0
        %v710 = vmax.f32 %v634, 0.0
        %v711 = vmax.f32 %v481, 0.0
        %v712 = vmax.f32 %v483, 0.0
        %v713 = vmax.f32 %v639, 0.0
        %v714 = vmax.f32 %v487, 0.0
        %v715 = vmax.f32 %v489, 0.0
        %v716 = vmax.f32 %v644, 0.0
        %v717 = vmax.f32 %v493, 0.0
        %v718 = vmax.f32 %v495, 0.0
        %v719 = vmax.f32 %v649, 0.0
        %v720 = vmax.f32 %v499, 0.0
        %v721 = vmax.f32 %v501, 0.0
        %v722 = vmax.f32 %v654, 0.0
        %v723 = vmax.f32 %v505, 0.0
        %v724 = vmax.f32 %v507, 0.0
        %v725 = vmax.f32 %v659, 0.0
        %v726 = vmax.f32 %v511, 0.0
        %v727 = vmax.f32 %v513, 0.0
        %v728 = vmax.f32 %v664, 0.0
        %v729 = vmax.f32 %v517, 0.0
        %v730 = vmax.f32 %v519, 0.0
        %v731 = vmax.f32 %v669, 0.0
        %v732 = vmax.f32 %v523, 0.0
        %v733 = vmax.f32 %v525, 0.0
        %v734 = vmax.f32 %v674, 0.0
        %v735 = vmax.f32 %v529, 0.0
        %v736 = vmax.f32 %v531, 0.0
        %v737 = vmax.f32 %v679, 0.0
        %v738 = vmax.f32 %v535, 0.0
        %v739 = vmax.f32 %v537, 0.0
        %v740 = vmax.f32 %v684, 0.0
        %v741 = vmax.f32 %v541, 0.0
        %v742 = vmax.f32 %v543, 0.0
        %v743 = vmax.f32 %v689, 0.0
        %v744 = vmax.f32 %v547, 0.0
        %v745 = vmax.f32 %v549, 0.0
        %v746 = vmax.f32 %v694, 0.0
        %v747 = vmax.f32 %v553, 0.0
        %v748 = vmax.f32 %v555, 0.0
        %v749 = vmax.f32 %v699, 0.0
        %v750 = vld [vmem:[#allocation5] sm:$0xff]
        %v751 = vld [vmem:[#allocation5 + $0x8] sm:$0xff]
        %v752 = vld [vmem:[#allocation5 + $0x10] sm:$0xff]
        %v753 = vld [vmem:[#allocation5 + $0x18] sm:$0xff]
        %v754 = vld [vmem:[#allocation5 + $0x20] sm:$0xff]
        %v755 = vld [vmem:[#allocation5 + $0x28] sm:$0xff]
        %v756 = vld [vmem:[#allocation5 + $0x30] sm:$0xff]
        %v757 = vld [vmem:[#allocation5 + $0x38] sm:$0xff]
        %v758 = vld [vmem:[#allocation5 + $0x40] sm:$0xff]
        %v759 = vld [vmem:[#allocation5 + $0x48] sm:$0xff]
        %v760 = vld [vmem:[#allocation5 + $0x50] sm:$0xff]
        %v761 = vld [vmem:[#allocation5 + $0x58] sm:$0xff]
        %v762 = vld [vmem:[#allocation5 + $0x60] sm:$0xff]
        %v763 = vld [vmem:[#allocation5 + $0x68] sm:$0xff]
        %v764 = vld [vmem:[#allocation5 + $0x70] sm:$0xff]
        %v765 = vld [vmem:[#allocation5 + $0x78] sm:$0xff]
        %v766 = vld [vmem:[#allocation5 + $0x80] sm:$0xff]
        %v767 = vld [vmem:[#allocation5 + $0x88] sm:$0xff]
        %v768 = vld [vmem:[#allocation5 + $0x90] sm:$0xff]
        %v769 = vld [vmem:[#allocation5 + $0x98] sm:$0xff]
        %v770 = vld [vmem:[#allocation5 + $0xa0] sm:$0xff]
        %v771 = vld [vmem:[#allocation5 + $0xa8] sm:$0xff]
        %v772 = vld [vmem:[#allocation5 + $0xb0] sm:$0xff]
        %v773 = vld [vmem:[#allocation5 + $0xb8] sm:$0xff]
        %v774 = vld [vmem:[#allocation5 + $0xc0] sm:$0xff]
        %v775 = vld [vmem:[#allocation5 + $0xc8] sm:$0xff]
        %v776 = vld [vmem:[#allocation5 + $0xd0] sm:$0xff]
        %v777 = vld [vmem:[#allocation5 + $0xd8] sm:$0xff]
        %v778 = vld [vmem:[#allocation5 + $0xe0] sm:$0xff]
        %v779 = vld [vmem:[#allocation5 + $0xe8] sm:$0xff]
        %v780 = vld [vmem:[#allocation5 + $0xf0] sm:$0xff]
        %v781 = vld [vmem:[#allocation5 + $0xf8] sm:$0xff]
        %v782 = vld [vmem:[#allocation5 + $0x100] sm:$0xff]
        %v783 = vld [vmem:[#allocation5 + $0x108] sm:$0xff]
        %v784 = vld [vmem:[#allocation5 + $0x110] sm:$0xff]
        %v785 = vld [vmem:[#allocation5 + $0x118] sm:$0xff]
        %v786 = vld [vmem:[#allocation5 + $0x120] sm:$0xff]
        %v787 = vld [vmem:[#allocation5 + $0x128] sm:$0xff]
        %v788 = vld [vmem:[#allocation5 + $0x130] sm:$0xff]
        %v789 = vld [vmem:[#allocation5 + $0x138] sm:$0xff]
        %v790 = vld [vmem:[#allocation5 + $0x140] sm:$0xff]
        %v791 = vld [vmem:[#allocation5 + $0x148] sm:$0xff]
        %v792 = vld [vmem:[#allocation5 + $0x150] sm:$0xff]
        %v793 = vld [vmem:[#allocation5 + $0x158] sm:$0xff]
        %v794 = vld [vmem:[#allocation5 + $0x160] sm:$0xff]
        %v795 = vld [vmem:[#allocation5 + $0x168] sm:$0xff]
        %v796 = vld [vmem:[#allocation5 + $0x170] sm:$0xff]
        %v797 = vld [vmem:[#allocation5 + $0x178] sm:$0xff]
        %v798 = vld [vmem:[#allocation5 + $0x180] sm:$0xff]
        %v799 = vld [vmem:[#allocation5 + $0x188] sm:$0xff]
        %v800 = vld [vmem:[#allocation5 + $0x190] sm:$0xff]
        %v801 = vld [vmem:[#allocation5 + $0x198] sm:$0xff]
        %v802 = vld [vmem:[#allocation5 + $0x1a0] sm:$0xff]
        %v803 = vld [vmem:[#allocation5 + $0x1a8] sm:$0xff]
        %v804 = vld [vmem:[#allocation5 + $0x1b0] sm:$0xff]
        %v805 = vld [vmem:[#allocation5 + $0x1b8] sm:$0xff]
        %v806 = vld [vmem:[#allocation5 + $0x1c0] sm:$0xff]
        %v807 = vld [vmem:[#allocation5 + $0x1c8] sm:$0xff]
        %v808 = vld [vmem:[#allocation5 + $0x1d0] sm:$0xff]
        %v809 = vld [vmem:[#allocation5 + $0x1d8] sm:$0xff]
        %v810 = vld [vmem:[#allocation5 + $0x1e0] sm:$0xff]
        %v811 = vld [vmem:[#allocation5 + $0x1e8] sm:$0xff]
        %v812 = vld [vmem:[#allocation5 + $0x1f0] sm:$0xff]
        %v813 = vld [vmem:[#allocation5 + $0x1f8] sm:$0xff]
        %v814 = vld [vmem:[#allocation5 + $0x200] sm:$0xff]
        %v815 = vld [vmem:[#allocation5 + $0x208] sm:$0xff]
        %v816 = vld [vmem:[#allocation5 + $0x210] sm:$0xff]
        %v817 = vld [vmem:[#allocation5 + $0x218] sm:$0xff]
        %v818 = vld [vmem:[#allocation5 + $0x220] sm:$0xff]
        %v819 = vld [vmem:[#allocation5 + $0x228] sm:$0xff]
        %v820 = vld [vmem:[#allocation5 + $0x230] sm:$0xff]
        %v821 = vld [vmem:[#allocation5 + $0x238] sm:$0xff]
        %v822 = vld [vmem:[#allocation5 + $0x240] sm:$0xff]
        %v823 = vld [vmem:[#allocation5 + $0x248] sm:$0xff]
        %v824 = vld [vmem:[#allocation5 + $0x250] sm:$0xff]
        %v825 = vld [vmem:[#allocation5 + $0x258] sm:$0xff]
        %v826 = vld [vmem:[#allocation5 + $0x260] sm:$0xff]
        %v827 = vld [vmem:[#allocation5 + $0x268] sm:$0xff]
        %v828 = vld [vmem:[#allocation5 + $0x270] sm:$0xff]
        %v829 = vld [vmem:[#allocation5 + $0x278] sm:$0xff]
        %v830 = vld [vmem:[#allocation5 + $0x280] sm:$0xff]
        %v831 = vld [vmem:[#allocation5 + $0x288] sm:$0xff]
        %v832 = vld [vmem:[#allocation5 + $0x290] sm:$0xff]
        %v833 = vld [vmem:[#allocation5 + $0x298] sm:$0xff]
        %v834 = vld [vmem:[#allocation5 + $0x2a0] sm:$0xff]
        %v835 = vld [vmem:[#allocation5 + $0x2a8] sm:$0xff]
        %v836 = vld [vmem:[#allocation5 + $0x2b0] sm:$0xff]
        %v837 = vld [vmem:[#allocation5 + $0x2b8] sm:$0xff]
        %v838 = vld [vmem:[#allocation5 + $0x2c0] sm:$0xff]
        %v839 = vld [vmem:[#allocation5 + $0x2c8] sm:$0xff]
        %v840 = vld [vmem:[#allocation5 + $0x2d0] sm:$0xff]
        %v841 = vld [vmem:[#allocation5 + $0x2d8] sm:$0xff]
        %v842 = vld [vmem:[#allocation5 + $0x2e0] sm:$0xff]
        %v843 = vld [vmem:[#allocation5 + $0x2e8] sm:$0xff]
        %v844 = vld [vmem:[#allocation5 + $0x2f0] sm:$0xff]
        %v845 = vld [vmem:[#allocation5 + $0x2f8] sm:$0xff]
        %v846 = vld [vmem:[%s4] sm:$0x3]
        %v848 = vlaneseq
        %v849 = vshrl.u32 %v848, 7
        %v850 = vsub.s32 0, %v849
        %v851 = vrot.slane %v846, %v850
        %v852 = vlaneseq
        %v853 = vshrl.u32 %v852, 7
        %v854 = vsub.s32 1, %v853
        %v855 = vrot.slane %v846, %v854
        %858 = vmatprep.subr.mxu0 %v751
        %859 = vmatpush1.msra.mxu0 %v750
        %860 = vmatprep.subr.mxu0 %v753
        %861 = vmatpush1.msra.mxu0 %v752
        %862 = vmatprep.subr.mxu0 %v755
        %863 = vmatpush1.msra.mxu0 %v754
        %864 = vmatprep.subr.mxu0 %v757
        %865 = vmatpush1.msra.mxu0 %v756
        %866 = vmatprep.subr.mxu0 %v759
        %867 = vmatpush1.msra.mxu0 %v758
        %868 = vmatprep.subr.mxu0 %v761
        %869 = vmatpush1.msra.mxu0 %v760
        %870 = vmatprep.subr.mxu0 %v763
        %871 = vmatpush1.msra.mxu0 %v762
        %872 = vmatprep.subr.mxu0 %v765
        %873 = vmatpush1.msra.mxu0 %v764
        %874 = vmatprep.subr.mxu0 %v767
        %875 = vmatpush1.msra.mxu0 %v766
        %876 = vmatprep.subr.mxu0 %v769
        %877 = vmatpush1.msra.mxu0 %v768
        %878 = vmatprep.subr.mxu0 %v771
        %879 = vmatpush1.msra.mxu0 %v770
        %880 = vmatprep.subr.mxu0 %v773
        %881 = vmatpush1.msra.mxu0 %v772
        %882 = vmatprep.subr.mxu0 %v775
        %883 = vmatpush1.msra.mxu0 %v774
        %884 = vmatprep.subr.mxu0 %v777
        %885 = vmatpush1.msra.mxu0 %v776
        %886 = vmatprep.subr.mxu0 %v779
        %887 = vmatpush1.msra.mxu0 %v778
        %888 = vmatprep.subr.mxu0 %v781
        %889 = vmatpush1.msra.mxu0 %v780
        %890 = vmatprep.subr.mxu0 %v783
        %891 = vmatpush1.msra.mxu0 %v782
        %892 = vmatprep.subr.mxu0 %v785
        %893 = vmatpush1.msra.mxu0 %v784
        %894 = vmatprep.subr.mxu0 %v787
        %895 = vmatpush1.msra.mxu0 %v786
        %896 = vmatprep.subr.mxu0 %v789
        %897 = vmatpush1.msra.mxu0 %v788
        %898 = vmatprep.subr.mxu0 %v791
        %899 = vmatpush1.msra.mxu0 %v790
        %900 = vmatprep.subr.mxu0 %v793
        %901 = vmatpush1.msra.mxu0 %v792
        %902 = vmatprep.subr.mxu0 %v795
        %903 = vmatpush1.msra.mxu0 %v794
        %904 = vmatprep.subr.mxu0 %v797
        %905 = vmatpush1.msra.mxu0 %v796
        %906 = vmatprep.subr.mxu0 %v799
        %907 = vmatpush1.msra.mxu0 %v798
        %908 = vmatprep.subr.mxu0 %v801
        %909 = vmatpush1.msra.mxu0 %v800
        %910 = vmatprep.subr.mxu0 %v803
        %911 = vmatpush1.msra.mxu0 %v802
        %912 = vmatprep.subr.mxu0 %v805
        %913 = vmatpush1.msra.mxu0 %v804
        %914 = vmatprep.subr.mxu0 %v807
        %915 = vmatpush1.msra.mxu0 %v806
        %916 = vmatprep.subr.mxu0 %v809
        %917 = vmatpush1.msra.mxu0 %v808
        %918 = vmatprep.subr.mxu0 %v811
        %919 = vmatpush1.msra.mxu0 %v810
        %920 = vmatprep.subr.mxu0 %v813
        %921 = vmatpush1.msra.mxu0 %v812
        %922 = vmatprep.mubr.f32.mxu0 %v703
        %923 = vmatmul.mubr.f32.gmra.mrb[0].mxu0 %v702
        %v924 = vpop.f32.mrb[0].mxu0
        %v925 = vadd.f32 %v851, %v924
        %v926 = vpop.f32.mrb[0].mxu0
        %v927 = vadd.f32 %v855, %v926
        %928 = vmatprep.mubr.f32.mxu0 %v706
        %929 = vmatmul.mubr.f32.gmra.mrb[0].mxu0 %v705
        %v930 = vpop.f32.mrb[0].mxu0
        %v931 = vadd.f32 %v851, %v930
        %v932 = vpop.f32.mrb[0].mxu0
        %v933 = vadd.f32 %v855, %v932
        %934 = vmatprep.mubr.f32.mxu0 %v709
        %935 = vmatmul.mubr.f32.gmra.mrb[0].mxu0 %v708
        %v936 = vpop.f32.mrb[0].mxu0
        %v937 = vadd.f32 %v851, %v936
        %v938 = vpop.f32.mrb[0].mxu0
        %v939 = vadd.f32 %v855, %v938
        %940 = vmatprep.mubr.f32.mxu0 %v712
        %941 = vmatmul.mubr.f32.gmra.mrb[0].mxu0 %v711
        %v942 = vpop.f32.mrb[0].mxu0
        %v943 = vadd.f32 %v851, %v942
        %v944 = vpop.f32.mrb[0].mxu0
        %v945 = vadd.f32 %v855, %v944
        %946 = vmatprep.mubr.f32.mxu0 %v715
        %947 = vmatmul.mubr.f32.gmra.mrb[0].mxu0 %v714
        %v948 = vpop.f32.mrb[0].mxu0
        %v949 = vadd.f32 %v851, %v948
        %v950 = vpop.f32.mrb[0].mxu0
        %v951 = vadd.f32 %v855, %v950
        %952 = vmatprep.mubr.f32.mxu0 %v718
        %953 = vmatmul.mubr.f32.gmra.mrb[0].mxu0 %v717
        %v954 = vpop.f32.mrb[0].mxu0
        %v955 = vadd.f32 %v851, %v954
        %v956 = vpop.f32.mrb[0].mxu0
        %v957 = vadd.f32 %v855, %v956
        %958 = vmatprep.mubr.f32.mxu0 %v721
        %959 = vmatmul.mubr.f32.gmra.mrb[0].mxu0 %v720
        %v960 = vpop.f32.mrb[0].mxu0
        %v961 = vadd.f32 %v851, %v960
        %v962 = vpop.f32.mrb[0].mxu0
        %v963 = vadd.f32 %v855, %v962
        %964 = vmatprep.mubr.f32.mxu0 %v724
        %965 = vmatmul.mubr.f32.gmra.mrb[0].mxu0 %v723
        %v966 = vpop.f32.mrb[0].mxu0
        %v967 = vadd.f32 %v851, %v966
        %v968 = vpop.f32.mrb[0].mxu0
        %v969 = vadd.f32 %v855, %v968
        %970 = vmatprep.mubr.f32.mxu0 %v727
        %971 = vmatmul.mubr.f32.gmra.mrb[0].mxu0 %v726
        %v972 = vpop.f32.mrb[0].mxu0
        %v973 = vadd.f32 %v851, %v972
        %v974 = vpop.f32.mrb[0].mxu0
        %v975 = vadd.f32 %v855, %v974
        %976 = vmatprep.mubr.f32.mxu0 %v730
        %977 = vmatmul.mubr.f32.gmra.mrb[0].mxu0 %v729
        %v978 = vpop.f32.mrb[0].mxu0
        %v979 = vadd.f32 %v851, %v978
        %v980 = vpop.f32.mrb[0].mxu0
        %v981 = vadd.f32 %v855, %v980
        %982 = vmatprep.mubr.f32.mxu0 %v733
        %983 = vmatmul.mubr.f32.gmra.mrb[0].mxu0 %v732
        %v984 = vpop.f32.mrb[0].mxu0
        %v985 = vadd.f32 %v851, %v984
        %v986 = vpop.f32.mrb[0].mxu0
        %v987 = vadd.f32 %v855, %v986
        %988 = vmatprep.mubr.f32.mxu0 %v736
        %989 = vmatmul.mubr.f32.gmra.mrb[0].mxu0 %v735
        %v990 = vpop.f32.mrb[0].mxu0
        %v991 = vadd.f32 %v851, %v990
        %v992 = vpop.f32.mrb[0].mxu0
        %v993 = vadd.f32 %v855, %v992
        %994 = vmatprep.mubr.f32.mxu0 %v739
        %995 = vmatmul.mubr.f32.gmra.mrb[0].mxu0 %v738
        %v996 = vpop.f32.mrb[0].mxu0
        %v997 = vadd.f32 %v851, %v996
        %v998 = vpop.f32.mrb[0].mxu0
        %v999 = vadd.f32 %v855, %v998
        %1000 = vmatprep.mubr.f32.mxu0 %v742
        %1001 = vmatmul.mubr.f32.gmra.mrb[0].mxu0 %v741
        %v1002 = vpop.f32.mrb[0].mxu0
        %v1003 = vadd.f32 %v851, %v1002
        %v1004 = vpop.f32.mrb[0].mxu0
        %v1005 = vadd.f32 %v855, %v1004
        %1006 = vmatprep.mubr.f32.mxu0 %v745
        %1007 = vmatmul.mubr.f32.gmra.mrb[0].mxu0 %v744
        %v1008 = vpop.f32.mrb[0].mxu0
        %v1009 = vadd.f32 %v851, %v1008
        %v1010 = vpop.f32.mrb[0].mxu0
        %v1011 = vadd.f32 %v855, %v1010
        %1012 = vmatprep.mubr.f32.mxu0 %v748
        %1013 = vmatmul.mubr.f32.gmra.mrb[0].mxu0 %v747
        %v1014 = vpop.f32.mrb[0].mxu0
        %v1015 = vadd.f32 %v851, %v1014
        %v1016 = vpop.f32.mrb[0].mxu0
        %v1017 = vadd.f32 %v855, %v1016
        %1018 = vdwg.mxu0
        %1019 = vmatprep.subr.mxu0 %v815
        %1020 = vmatpush1.msra.mxu0 %v814
        %1021 = vmatprep.subr.mxu0 %v817
        %1022 = vmatpush1.msra.mxu0 %v816
        %1023 = vmatprep.subr.mxu0 %v819
        %1024 = vmatpush1.msra.mxu0 %v818
        %1025 = vmatprep.subr.mxu0 %v821
        %1026 = vmatpush1.msra.mxu0 %v820
        %1027 = vmatprep.subr.mxu0 %v823
        %1028 = vmatpush1.msra.mxu0 %v822
        %1029 = vmatprep.subr.mxu0 %v825
        %1030 = vmatpush1.msra.mxu0 %v824
        %1031 = vmatprep.subr.mxu0 %v827
        %1032 = vmatpush1.msra.mxu0 %v826
        %1033 = vmatprep.subr.mxu0 %v829
        %1034 = vmatpush1.msra.mxu0 %v828
        %1035 = vmatprep.subr.mxu0 %v831
        %1036 = vmatpush1.msra.mxu0 %v830
        %1037 = vmatprep.subr.mxu0 %v833
        %1038 = vmatpush1.msra.mxu0 %v832
        %1039 = vmatprep.subr.mxu0 %v835
        %1040 = vmatpush1.msra.mxu0 %v834
        %1041 = vmatprep.subr.mxu0 %v837
        %1042 = vmatpush1.msra.mxu0 %v836
        %1043 = vmatprep.subr.mxu0 %v839
        %1044 = vmatpush1.msra.mxu0 %v838
        %1045 = vmatprep.subr.mxu0 %v841
        %1046 = vmatpush1.msra.mxu0 %v840
        %1047 = vmatprep.subr.mxu0 %v843
        %1048 = vmatpush1.msra.mxu0 %v842
        %1049 = vmatprep.subr.mxu0 %v845
        %1050 = vmatpush1.msra.mxu0 %v844
        %1051 = vmatprep.subr.mxu0 0.0
        %1052 = vmatpush1.msra.mxu0 0.0
        %1053 = vmatprep.subr.mxu0 0.0
        %1054 = vmatpush1.msra.mxu0 0.0
        %1055 = vmatprep.subr.mxu0 0.0
        %1056 = vmatpush1.msra.mxu0 0.0
        %1057 = vmatprep.subr.mxu0 0.0
        %1058 = vmatpush1.msra.mxu0 0.0
        %1059 = vmatprep.subr.mxu0 0.0
        %1060 = vmatpush1.msra.mxu0 0.0
        %1061 = vmatprep.subr.mxu0 0.0
        %1062 = vmatpush1.msra.mxu0 0.0
        %1063 = vmatprep.subr.mxu0 0.0
        %1064 = vmatpush1.msra.mxu0 0.0
        %1065 = vmatprep.subr.mxu0 0.0
        %1066 = vmatpush1.msra.mxu0 0.0
        %1067 = vmatprep.subr.mxu0 0.0
        %1068 = vmatpush1.msra.mxu0 0.0
        %1069 = vmatprep.subr.mxu0 0.0
        %1070 = vmatpush1.msra.mxu0 0.0
        %1071 = vmatprep.subr.mxu0 0.0
        %1072 = vmatpush1.msra.mxu0 0.0
        %1073 = vmatprep.subr.mxu0 0.0
        %1074 = vmatpush1.msra.mxu0 0.0
        %1075 = vmatprep.subr.mxu0 0.0
        %1076 = vmatpush1.msra.mxu0 0.0
        %1077 = vmatprep.subr.mxu0 0.0
        %1078 = vmatpush1.msra.mxu0 0.0
        %1079 = vmatprep.subr.mxu0 0.0
        %1080 = vmatpush1.msra.mxu0 0.0
        %1081 = vmatprep.subr.mxu0 0.0
        %1082 = vmatpush1.msra.mxu0 0.0
        %1083 = vmatprep.mubr.f32.mxu0 0.0
        %1084 = vmatmul.mubr.f32.gmra.mrb[0].mxu0 %v704
        %v1085 = vpop.f32.mrb[0].mxu0
        %v1086 = vadd.f32 %v925, %v1085
        %v1087 = vpop.f32.mrb[0].mxu0
        %v1088 = vadd.f32 %v927, %v1087
        %1089 = vmatprep.mubr.f32.mxu0 0.0
        %1090 = vmatmul.mubr.f32.gmra.mrb[0].mxu0 %v707
        %v1091 = vpop.f32.mrb[0].mxu0
        %v1092 = vadd.f32 %v931, %v1091
        %v1093 = vpop.f32.mrb[0].mxu0
        %v1094 = vadd.f32 %v933, %v1093
        %1095 = vmatprep.mubr.f32.mxu0 0.0
        %1096 = vmatmul.mubr.f32.gmra.mrb[0].mxu0 %v710
        %v1097 = vpop.f32.mrb[0].mxu0
        %v1098 = vadd.f32 %v937, %v1097
        %v1099 = vpop.f32.mrb[0].mxu0
        %v1100 = vadd.f32 %v939, %v1099
        %1101 = vmatprep.mubr.f32.mxu0 0.0
        %1102 = vmatmul.mubr.f32.gmra.mrb[0].mxu0 %v713
        %v1103 = vpop.f32.mrb[0].mxu0
        %v1104 = vadd.f32 %v943, %v1103
        %v1105 = vpop.f32.mrb[0].mxu0
        %v1106 = vadd.f32 %v945, %v1105
        %1107 = vmatprep.mubr.f32.mxu0 0.0
        %1108 = vmatmul.mubr.f32.gmra.mrb[0].mxu0 %v716
        %v1109 = vpop.f32.mrb[0].mxu0
        %v1110 = vadd.f32 %v949, %v1109
        %v1111 = vpop.f32.mrb[0].mxu0
        %v1112 = vadd.f32 %v951, %v1111
        %1113 = vmatprep.mubr.f32.mxu0 0.0
        %1114 = vmatmul.mubr.f32.gmra.mrb[0].mxu0 %v719
        %v1115 = vpop.f32.mrb[0].mxu0
        %v1116 = vadd.f32 %v955, %v1115
        %v1117 = vpop.f32.mrb[0].mxu0
        %v1118 = vadd.f32 %v957, %v1117
        %1119 = vmatprep.mubr.f32.mxu0 0.0
        %1120 = vmatmul.mubr.f32.gmra.mrb[0].mxu0 %v722
        %v1121 = vpop.f32.mrb[0].mxu0
        %v1122 = vadd.f32 %v961, %v1121
        %v1123 = vpop.f32.mrb[0].mxu0
        %v1124 = vadd.f32 %v963, %v1123
        %1125 = vmatprep.mubr.f32.mxu0 0.0
        %1126 = vmatmul.mubr.f32.gmra.mrb[0].mxu0 %v725
        %v1127 = vpop.f32.mrb[0].mxu0
        %v1128 = vadd.f32 %v967, %v1127
        %v1129 = vpop.f32.mrb[0].mxu0
        %v1130 = vadd.f32 %v969, %v1129
        %1131 = vmatprep.mubr.f32.mxu0 0.0
        %1132 = vmatmul.mubr.f32.gmra.mrb[0].mxu0 %v728
        %v1133 = vpop.f32.mrb[0].mxu0
        %v1134 = vadd.f32 %v973, %v1133
        %v1135 = vpop.f32.mrb[0].mxu0
        %v1136 = vadd.f32 %v975, %v1135
        %1137 = vmatprep.mubr.f32.mxu0 0.0
        %1138 = vmatmul.mubr.f32.gmra.mrb[0].mxu0 %v731
        %v1139 = vpop.f32.mrb[0].mxu0
        %v1140 = vadd.f32 %v979, %v1139
        %v1141 = vpop.f32.mrb[0].mxu0
        %v1142 = vadd.f32 %v981, %v1141
        %1143 = vmatprep.mubr.f32.mxu0 0.0
        %1144 = vmatmul.mubr.f32.gmra.mrb[0].mxu0 %v734
        %v1145 = vpop.f32.mrb[0].mxu0
        %v1146 = vadd.f32 %v985, %v1145
        %v1147 = vpop.f32.mrb[0].mxu0
        %v1148 = vadd.f32 %v987, %v1147
        %1149 = vmatprep.mubr.f32.mxu0 0.0
        %1150 = vmatmul.mubr.f32.gmra.mrb[0].mxu0 %v737
        %v1151 = vpop.f32.mrb[0].mxu0
        %v1152 = vadd.f32 %v991, %v1151
        %v1153 = vpop.f32.mrb[0].mxu0
        %v1154 = vadd.f32 %v993, %v1153
        %1155 = vmatprep.mubr.f32.mxu0 0.0
        %1156 = vmatmul.mubr.f32.gmra.mrb[0].mxu0 %v740
        %v1157 = vpop.f32.mrb[0].mxu0
        %v1158 = vadd.f32 %v997, %v1157
        %v1159 = vpop.f32.mrb[0].mxu0
        %v1160 = vadd.f32 %v999, %v1159
        %1161 = vmatprep.mubr.f32.mxu0 0.0
        %1162 = vmatmul.mubr.f32.gmra.mrb[0].mxu0 %v743
        %v1163 = vpop.f32.mrb[0].mxu0
        %v1164 = vadd.f32 %v1003, %v1163
        %v1165 = vpop.f32.mrb[0].mxu0
        %v1166 = vadd.f32 %v1005, %v1165
        %1167 = vmatprep.mubr.f32.mxu0 0.0
        %1168 = vmatmul.mubr.f32.gmra.mrb[0].mxu0 %v746
        %v1169 = vpop.f32.mrb[0].mxu0
        %v1170 = vadd.f32 %v1009, %v1169
        %v1171 = vpop.f32.mrb[0].mxu0
        %v1172 = vadd.f32 %v1011, %v1171
        %1173 = vmatprep.mubr.f32.mxu0 0.0
        %1174 = vmatmul.mubr.f32.gmra.mrb[0].mxu0 %v749
        %v1175 = vpop.f32.mrb[0].mxu0
        %v1176 = vadd.f32 %v1015, %v1175
        %v1177 = vpop.f32.mrb[0].mxu0
        %v1178 = vadd.f32 %v1017, %v1177
        %1179 = vdwg.mxu0
        %v1180 = vmax.f32 %v1086, 0.0
        %v1181 = vmax.f32 %v1088, 0.0
        %v1182 = vmax.f32 %v1092, 0.0
        %v1183 = vmax.f32 %v1094, 0.0
        %v1184 = vmax.f32 %v1098, 0.0
        %v1185 = vmax.f32 %v1100, 0.0
        %v1186 = vmax.f32 %v1104, 0.0
        %v1187 = vmax.f32 %v1106, 0.0
        %v1188 = vmax.f32 %v1110, 0.0
        %v1189 = vmax.f32 %v1112, 0.0
        %v1190 = vmax.f32 %v1116, 0.0
        %v1191 = vmax.f32 %v1118, 0.0
        %v1192 = vmax.f32 %v1122, 0.0
        %v1193 = vmax.f32 %v1124, 0.0
        %v1194 = vmax.f32 %v1128, 0.0
        %v1195 = vmax.f32 %v1130, 0.0
        %v1196 = vmax.f32 %v1134, 0.0
        %v1197 = vmax.f32 %v1136, 0.0
        %v1198 = vmax.f32 %v1140, 0.0
        %v1199 = vmax.f32 %v1142, 0.0
        %v1200 = vmax.f32 %v1146, 0.0
        %v1201 = vmax.f32 %v1148, 0.0
        %v1202 = vmax.f32 %v1152, 0.0
        %v1203 = vmax.f32 %v1154, 0.0
        %v1204 = vmax.f32 %v1158, 0.0
        %v1205 = vmax.f32 %v1160, 0.0
        %v1206 = vmax.f32 %v1164, 0.0
        %v1207 = vmax.f32 %v1166, 0.0
        %v1208 = vmax.f32 %v1170, 0.0
        %v1209 = vmax.f32 %v1172, 0.0
        %v1210 = vmax.f32 %v1176, 0.0
        %v1211 = vmax.f32 %v1178, 0.0
        %v1212 = vld [vmem:[%s5] sm:$0xff]
        %v1213 = vld [vmem:[%s5 + $0x8] sm:$0xff]
        %v1214 = vld [vmem:[%s5 + $0x10] sm:$0xff]
        %v1215 = vld [vmem:[%s5 + $0x18] sm:$0xff]
        %v1216 = vld [vmem:[%s5 + $0x20] sm:$0xff]
        %v1217 = vld [vmem:[%s5 + $0x28] sm:$0xff]
        %v1218 = vld [vmem:[%s5 + $0x30] sm:$0xff]
        %v1219 = vld [vmem:[%s5 + $0x38] sm:$0xff]
        %v1220 = vld [vmem:[%s5 + $0x40] sm:$0xff]
        %v1221 = vld [vmem:[%s5 + $0x48] sm:$0xff]
        %v1222 = vld [vmem:[%s5 + $0x50] sm:$0xff]
        %v1223 = vld [vmem:[%s5 + $0x58] sm:$0xff]
        %v1224 = vld [vmem:[%s5 + $0x60] sm:$0xff]
        %v1225 = vld [vmem:[%s5 + $0x68] sm:$0xff]
        %v1226 = vld [vmem:[%s5 + $0x70] sm:$0xff]
        %v1227 = vld [vmem:[%s5 + $0x78] sm:$0xff]
        %v1228 = vld [vmem:[%s5 + $0x80] sm:$0xff]
        %v1229 = vld [vmem:[%s5 + $0x88] sm:$0xff]
        %v1230 = vld [vmem:[%s5 + $0x90] sm:$0xff]
        %v1231 = vld [vmem:[%s5 + $0x98] sm:$0xff]
        %v1232 = vld [vmem:[%s5 + $0xa0] sm:$0xff]
        %v1233 = vld [vmem:[%s5 + $0xa8] sm:$0xff]
        %v1234 = vld [vmem:[%s5 + $0xb0] sm:$0xff]
        %v1235 = vld [vmem:[%s5 + $0xb8] sm:$0xff]
        %v1236 = vld [vmem:[%s5 + $0xc0] sm:$0xff]
        %v1237 = vld [vmem:[%s5 + $0xc8] sm:$0xff]
        %v1238 = vld [vmem:[%s5 + $0xd0] sm:$0xff]
        %v1239 = vld [vmem:[%s5 + $0xd8] sm:$0xff]
        %v1240 = vld [vmem:[%s5 + $0xe0] sm:$0xff]
        %v1241 = vld [vmem:[%s5 + $0xe8] sm:$0xff]
        %v1242 = vld [vmem:[%s5 + $0xf0] sm:$0xff]
        %v1243 = vld [vmem:[%s5 + $0xf8] sm:$0xff]
        %v1244 = vld [vmem:[%s6] sm:$0x1]
        %v1246 = vlaneseq
        %v1247 = vshrl.u32 %v1246, 7
        %v1248 = vsub.s32 0, %v1247
        %v1249 = vrot.slane %v1244, %v1248
        %1251 = vmatprep.subr.mxu0 0.0
        %1252 = vmatpush1.msra.mxu0 %v1212
        %1253 = vmatprep.subr.mxu0 0.0
        %1254 = vmatpush1.msra.mxu0 %v1213
        %1255 = vmatprep.subr.mxu0 0.0
        %1256 = vmatpush1.msra.mxu0 %v1214
        %1257 = vmatprep.subr.mxu0 0.0
        %1258 = vmatpush1.msra.mxu0 %v1215
        %1259 = vmatprep.subr.mxu0 0.0
        %1260 = vmatpush1.msra.mxu0 %v1216
        %1261 = vmatprep.subr.mxu0 0.0
        %1262 = vmatpush1.msra.mxu0 %v1217
        %1263 = vmatprep.subr.mxu0 0.0
        %1264 = vmatpush1.msra.mxu0 %v1218
        %1265 = vmatprep.subr.mxu0 0.0
        %1266 = vmatpush1.msra.mxu0 %v1219
        %1267 = vmatprep.subr.mxu0 0.0
        %1268 = vmatpush1.msra.mxu0 %v1220
        %1269 = vmatprep.subr.mxu0 0.0
        %1270 = vmatpush1.msra.mxu0 %v1221
        %1271 = vmatprep.subr.mxu0 0.0
        %1272 = vmatpush1.msra.mxu0 %v1222
        %1273 = vmatprep.subr.mxu0 0.0
        %1274 = vmatpush1.msra.mxu0 %v1223
        %1275 = vmatprep.subr.mxu0 0.0
        %1276 = vmatpush1.msra.mxu0 %v1224
        %1277 = vmatprep.subr.mxu0 0.0
        %1278 = vmatpush1.msra.mxu0 %v1225
        %1279 = vmatprep.subr.mxu0 0.0
        %1280 = vmatpush1.msra.mxu0 %v1226
        %1281 = vmatprep.subr.mxu0 0.0
        %1282 = vmatpush1.msra.mxu0 %v1227
        %1283 = vmatprep.subr.mxu0 0.0
        %1284 = vmatpush1.msra.mxu0 %v1228
        %1285 = vmatprep.subr.mxu0 0.0
        %1286 = vmatpush1.msra.mxu0 %v1229
        %1287 = vmatprep.subr.mxu0 0.0
        %1288 = vmatpush1.msra.mxu0 %v1230
        %1289 = vmatprep.subr.mxu0 0.0
        %1290 = vmatpush1.msra.mxu0 %v1231
        %1291 = vmatprep.subr.mxu0 0.0
        %1292 = vmatpush1.msra.mxu0 %v1232
        %1293 = vmatprep.subr.mxu0 0.0
        %1294 = vmatpush1.msra.mxu0 %v1233
        %1295 = vmatprep.subr.mxu0 0.0
        %1296 = vmatpush1.msra.mxu0 %v1234
        %1297 = vmatprep.subr.mxu0 0.0
        %1298 = vmatpush1.msra.mxu0 %v1235
        %1299 = vmatprep.subr.mxu0 0.0
        %1300 = vmatpush1.msra.mxu0 %v1236
        %1301 = vmatprep.subr.mxu0 0.0
        %1302 = vmatpush1.msra.mxu0 %v1237
        %1303 = vmatprep.subr.mxu0 0.0
        %1304 = vmatpush1.msra.mxu0 %v1238
        %1305 = vmatprep.subr.mxu0 0.0
        %1306 = vmatpush1.msra.mxu0 %v1239
        %1307 = vmatprep.subr.mxu0 0.0
        %1308 = vmatpush1.msra.mxu0 %v1240
        %1309 = vmatprep.subr.mxu0 0.0
        %1310 = vmatpush1.msra.mxu0 %v1241
        %1311 = vmatprep.subr.mxu0 0.0
        %1312 = vmatpush1.msra.mxu0 %v1242
        %1313 = vmatprep.subr.mxu0 0.0
        %1314 = vmatpush1.msra.mxu0 %v1243
        %1315 = vmatprep.mubr.f32.mxu0 %v1181
        %1316 = vmatmul.mubr.f32.gmra.mrb[0].mxu0 %v1180
        %v1317 = vpop.f32.mrb[0].mxu0
        %v1318 = vadd.f32 %v1249, %v1317
        %v1319 = vpop.f32.mrb[0].mxu0
        %1320 = vmatprep.mubr.f32.mxu0 %v1183
        %1321 = vmatmul.mubr.f32.gmra.mrb[0].mxu0 %v1182
        %v1322 = vpop.f32.mrb[0].mxu0
        %v1323 = vadd.f32 %v1249, %v1322
        %v1324 = vpop.f32.mrb[0].mxu0
        %1325 = vmatprep.mubr.f32.mxu0 %v1185
        %1326 = vmatmul.mubr.f32.gmra.mrb[0].mxu0 %v1184
        %v1327 = vpop.f32.mrb[0].mxu0
        %v1328 = vadd.f32 %v1249, %v1327
        %v1329 = vpop.f32.mrb[0].mxu0
        %1330 = vmatprep.mubr.f32.mxu0 %v1187
        %1331 = vmatmul.mubr.f32.gmra.mrb[0].mxu0 %v1186
        %v1332 = vpop.f32.mrb[0].mxu0
        %v1333 = vadd.f32 %v1249, %v1332
        %v1334 = vpop.f32.mrb[0].mxu0
        %1335 = vmatprep.mubr.f32.mxu0 %v1189
        %1336 = vmatmul.mubr.f32.gmra.mrb[0].mxu0 %v1188
        %v1337 = vpop.f32.mrb[0].mxu0
        %v1338 = vadd.f32 %v1249, %v1337
        %v1339 = vpop.f32.mrb[0].mxu0
        %1340 = vmatprep.mubr.f32.mxu0 %v1191
        %1341 = vmatmul.mubr.f32.gmra.mrb[0].mxu0 %v1190
        %v1342 = vpop.f32.mrb[0].mxu0
        %v1343 = vadd.f32 %v1249, %v1342
        %v1344 = vpop.f32.mrb[0].mxu0
        %1345 = vmatprep.mubr.f32.mxu0 %v1193
        %1346 = vmatmul.mubr.f32.gmra.mrb[0].mxu0 %v1192
        %v1347 = vpop.f32.mrb[0].mxu0
        %v1348 = vadd.f32 %v1249, %v1347
        %v1349 = vpop.f32.mrb[0].mxu0
        %1350 = vmatprep.mubr.f32.mxu0 %v1195
        %1351 = vmatmul.mubr.f32.gmra.mrb[0].mxu0 %v1194
        %v1352 = vpop.f32.mrb[0].mxu0
        %v1353 = vadd.f32 %v1249, %v1352
        %v1354 = vpop.f32.mrb[0].mxu0
        %1355 = vmatprep.mubr.f32.mxu0 %v1197
        %1356 = vmatmul.mubr.f32.gmra.mrb[0].mxu0 %v1196
        %v1357 = vpop.f32.mrb[0].mxu0
        %v1358 = vadd.f32 %v1249, %v1357
        %v1359 = vpop.f32.mrb[0].mxu0
        %1360 = vmatprep.mubr.f32.mxu0 %v1199
        %1361 = vmatmul.mubr.f32.gmra.mrb[0].mxu0 %v1198
        %v1362 = vpop.f32.mrb[0].mxu0
        %v1363 = vadd.f32 %v1249, %v1362
        %v1364 = vpop.f32.mrb[0].mxu0
        %1365 = vmatprep.mubr.f32.mxu0 %v1201
        %1366 = vmatmul.mubr.f32.gmra.mrb[0].mxu0 %v1200
        %v1367 = vpop.f32.mrb[0].mxu0
        %v1368 = vadd.f32 %v1249, %v1367
        %v1369 = vpop.f32.mrb[0].mxu0
        %1370 = vmatprep.mubr.f32.mxu0 %v1203
        %1371 = vmatmul.mubr.f32.gmra.mrb[0].mxu0 %v1202
        %v1372 = vpop.f32.mrb[0].mxu0
        %v1373 = vadd.f32 %v1249, %v1372
        %v1374 = vpop.f32.mrb[0].mxu0
        %1375 = vmatprep.mubr.f32.mxu0 %v1205
        %1376 = vmatmul.mubr.f32.gmra.mrb[0].mxu0 %v1204
        %v1377 = vpop.f32.mrb[0].mxu0
        %v1378 = vadd.f32 %v1249, %v1377
        %v1379 = vpop.f32.mrb[0].mxu0
        %1380 = vmatprep.mubr.f32.mxu0 %v1207
        %1381 = vmatmul.mubr.f32.gmra.mrb[0].mxu0 %v1206
        %v1382 = vpop.f32.mrb[0].mxu0
        %v1383 = vadd.f32 %v1249, %v1382
        %v1384 = vpop.f32.mrb[0].mxu0
        %1385 = vmatprep.mubr.f32.mxu0 %v1209
        %1386 = vmatmul.mubr.f32.gmra.mrb[0].mxu0 %v1208
        %v1387 = vpop.f32.mrb[0].mxu0
        %v1388 = vadd.f32 %v1249, %v1387
        %v1389 = vpop.f32.mrb[0].mxu0
        %1390 = vmatprep.mubr.f32.mxu0 %v1211
        %1391 = vmatmul.mubr.f32.gmra.mrb[0].mxu0 %v1210
        %v1392 = vpop.f32.mrb[0].mxu0
        %v1393 = vadd.f32 %v1249, %v1392
        %v1394 = vpop.f32.mrb[0].mxu0
        %1395 = vdwg.mxu0
        %v1396 = vtanh.pop %v1318
        %v1397 = vtanh.pop %v1323
        %v1398 = vtanh.pop %v1328
        %v1399 = vtanh.pop %v1333
        %v1400 = vtanh.pop %v1338
        %v1401 = vtanh.pop %v1343
        %v1402 = vtanh.pop %v1348
        %v1403 = vtanh.pop %v1353
        %v1404 = vtanh.pop %v1358
        %v1405 = vtanh.pop %v1363
        %v1406 = vtanh.pop %v1368
        %v1407 = vtanh.pop %v1373
        %v1408 = vtanh.pop %v1378
        %v1409 = vtanh.pop %v1383
        %v1410 = vtanh.pop %v1388
        %v1411 = vtanh.pop %v1393
        %1412 = vst [vmem:[%s300] sm:$0xff] %v1396
        %1413 = vst [vmem:[%s300 + $0x8] sm:$0xff] %v1397
        %1414 = vst [vmem:[%s300 + $0x10] sm:$0xff] %v1398
        %1415 = vst [vmem:[%s300 + $0x18] sm:$0xff] %v1399
        %1416 = vst [vmem:[%s300 + $0x20] sm:$0xff] %v1400
        %1417 = vst [vmem:[%s300 + $0x28] sm:$0xff] %v1401
        %1418 = vst [vmem:[%s300 + $0x30] sm:$0xff] %v1402
        %1419 = vst [vmem:[%s300 + $0x38] sm:$0xff] %v1403
        %1420 = vst [vmem:[%s300 + $0x40] sm:$0xff] %v1404
        %1421 = vst [vmem:[%s300 + $0x48] sm:$0xff] %v1405
        %1422 = vst [vmem:[%s300 + $0x50] sm:$0xff] %v1406
        %1423 = vst [vmem:[%s300 + $0x58] sm:$0xff] %v1407
        %1424 = vst [vmem:[%s300 + $0x60] sm:$0xff] %v1408
        %1425 = vst [vmem:[%s300 + $0x68] sm:$0xff] %v1409
        %1426 = vst [vmem:[%s300 + $0x70] sm:$0xff] %v1410
        %1427 = vst [vmem:[%s300 + $0x78] sm:$0xff] %v1411
        %s1428 = sand.u32 %s183, 1
        %s1429 = scalar_lea.sflag [#allocation4], %s1428
        %s1430 = sand.u32 %s183, 1
        %s1431 = smul.addr %s1430, 128
        %s1432 = scalar_lea.vmem [#allocation7], %s1431
        // Predicated region
        $region57: #{tpu_custom_call.1} parent=47 // pred_check
          %p1433 = pneg %p193
        $region58: #{tpu_custom_call.1} parent=47 // pred_check_branch
          %1435 = sbr.rel (%p1433) target = $region60
        $region59: #{tpu_custom_call.1} parent=47 // pred_region
          %s1436 = smul.u32 16, %s23
          %s1438 = ssub.s32 2048, 2048
          %1439 = vsyncadd %s1429, %s1438
          %s1440 = smul.addr %s1436, 128
          %s1441 = scalar_lea.hbm %s7, %s1440
          %s1442 = sshll.u32 %s1432, 4
          %s1443 = int_to_ptr.vmem [resolvable:$true] %s1442
          %1448 = dma.vmem_to_hbm [thread:$0]  %s1443, 2048, %s1441, %s1429, 128, 128, 8
        $region60: #{tpu_custom_call.1} parent=47 // pred_fallthru
          _
      $region48: #{tpu_custom_call.1} parent=5 // pred_fallthru
        _
      %p1449 = scmp.le.s32.totalorder 2, %s18
      // Predicated region
      $region61: #{tpu_custom_call.1} parent=5 // pred_check
        %p1450 = pneg %p1449
      $region62: #{tpu_custom_call.1} parent=5 // pred_check_branch
        %1452 = sbr.rel (%p1450) target = $region64
      $region63: #{tpu_custom_call.1} parent=5 // pred_region
        %s1453 = ssub.s32 %s18, 2
        // Predicated region
        $region65: #{tpu_custom_call.1} parent=63 // pred_check
          %p1454 = pneg %p199
        $region66: #{tpu_custom_call.1} parent=63 // pred_check_branch
          %1456 = sbr.rel (%p1454) target = $region68
        $region67: #{tpu_custom_call.1} parent=63 // pred_region
          %s1457 = sand.u32 %s184, 1
          %s1458 = scalar_lea.sflag [#allocation4], %s1457
          %s1459 = sand.u32 %s184, 1
          %s1460 = smul.addr %s1459, 128
          %s1461 = scalar_lea.vmem [#allocation7], %s1460
          %1462 = dma.done %s1458, 2048
        $region68: #{tpu_custom_call.1} parent=63 // pred_fallthru
          _
      $region64: #{tpu_custom_call.1} parent=5 // pred_fallthru
        _
    $region6: #{tpu_custom_call.1} parent=1 // loop_footer
      %s22 = sadd.s32 1, %s18
    $region7: #{tpu_custom_call.1} parent=1 // loop_footer_branch
      %17 = sbr.rel target = $region3
    $region8: #{tpu_custom_call.1} parent=1 // loop_exit
      _
    %1463 = vsyncpa [#allocation3], 1
    %s1464 = scalar_lea.sflag [#allocation3], 1
    %1465 = vsyncpa %s1464, 1
    %1466 = vsyncpa [#allocation6], 1
    %1467 = vsyncpa [#allocation4], 1
    %s1468 = scalar_lea.sflag [#allocation4], 1
    %1469 = vsyncpa %s1468, 1

</llo_original>
